<compile_context>
chip_gen: v6e
topology: v6e:2x2x1
jax: 0.10.0
libtpu: 0.0.40
codegen_flags: <defaults>
</compile_context>

<pallas_src>
import jax
import jax.numpy as jnp
from jax.experimental import pallas as pl
from jax.experimental.pallas import tpu as pltpu


def cbow_kernel(ctx_ref, wt_ref, b_ref, out_ref):
    """One batch tile of the CBOW forward.

    ctx_ref: (TB, D) bf16  context-mean embeddings for this batch tile
    wt_ref : (D, V)  bf16  linear weight, pre-transposed
    b_ref  : (1, V)  f32   linear bias
    out_ref: (TB, V)       log-probabilities
    """
    # MXU: bf16 x bf16 inputs, f32 accumulation.
    logits = jnp.dot(ctx_ref[...], wt_ref[...],
                     preferred_element_type=jnp.float32)       # (TB, V)
    logits = logits + b_ref[...]                               # broadcast (1, V)

    # Numerically stable log_softmax over the (full, untiled) vocab axis.
    # f32 epilogue on purpose: v5e's EUP/VPU have no bf16 path.
    m = jnp.max(logits, axis=1, keepdims=True)                 # (TB, 1)
    shifted = logits - m
    lse = jnp.log(jnp.sum(jnp.exp(shifted), axis=1, keepdims=True))
    out_ref[...] = (shifted - lse).astype(out_ref.dtype)
    # TODO(synk): on v6e/v7x with large V the exp over (TB, V) saturates the
    # EUP before the MXU; options are a bf16 exp with f32 sum accumulation, or
    # emitting (logits, lse) instead of full log-probs when the consumer is an
    # NLL loss.


def prepare_cbow_params(lin_w, lin_b):
    """One-time parameter layout prep (cache across forward calls).

    lin_w: (V, D) f32, lin_b: (V,) f32  ->  w_t: (D, V) bf16, b2: (1, V) f32.
    Doing this per parameter update (not per forward) avoids an extra
    full-weight HBM read + transpose + write before every kernel launch.
    """
    w_t = lin_w.T.astype(jnp.bfloat16)                 # (D, V)
    b2 = lin_b.reshape(1, -1).astype(jnp.float32)      # (1, V)
    return w_t, b2


def cbow_forward(token_ids, emb_table, w_t, b2, *, block_b=256,
                 out_dtype=jnp.float32):
    """token_ids: (B, C) int32; emb_table: (V, D) f32; w_t: (D, V) bf16; b2: (1, V) f32.

    Returns (B, V) log-probabilities (out_dtype, default f32), matching torch
    CBOW.forward.  Pass out_dtype=jnp.bfloat16 to halve the output HBM stream
    if the consumer tolerates it.
    """
    B, C = token_ids.shape
    D, V = w_t.shape

    # Batch tile: 256 rows fills the v6e/v7x MXU row dimension and amortizes
    # the ~0.35 us per-grid-step overhead; rounded to the sublane quantum.
    tb = min(block_b, B)
    tb = max(8, ((tb + 7) // 8) * 8)
    B_pad = pl.cdiv(B, tb) * tb
    if B_pad != B:
        token_ids = jnp.pad(token_ids, ((0, B_pad - B), (0, 0)))

    # Embedding gather + context mean + bf16 cast: XLA fuses these into a
    # single (B_pad, D) bf16 producer, so the kernel's activation stream is a
    # dense (tb, D) block (no (B, C, D) round trip, no half-empty vregs).
    # The mean is taken in f32 *before* the bf16 cast (no 1/C folded into the
    # bf16 weight -> one fewer rounding step).
    # TODO(synk): fuse the gather itself into the kernel (scalar-prefetched
    # token ids + VMEM-resident table for small V, or per-row make_async_copy
    # from an ANY-space table for large V) to also remove this (B, D) round trip.
    ctx = jnp.take(emb_table, token_ids, axis=0).mean(axis=1)  # (B_pad, D) f32
    ctx = ctx.astype(jnp.bfloat16)

    grid = (B_pad // tb,)
    out = pl.pallas_call(
        cbow_kernel,
        out_shape=jax.ShapeDtypeStruct((B_pad, V), out_dtype),
        grid=grid,
        in_specs=[
            # Batch-tiled context means: dense (tb, D) bf16 blocks.
            pl.BlockSpec((tb, D), lambda i: (i, 0)),
            # Full bf16 weight / f32 bias: constant index_map -> single buffer
            # is enough; reclaims VMEM (matters on v7x's 64 MiB/TC).
            pl.BlockSpec((D, V), lambda i: (0, 0), pipeline_mode=pl.Buffered(1)),
            pl.BlockSpec((1, V), lambda i: (0, 0), pipeline_mode=pl.Buffered(1)),
        ],
        out_specs=pl.BlockSpec((tb, V), lambda i: (i, 0)),  # lane-dense (V % 128 == 0)
        compiler_params=pltpu.CompilerParams(
            # Independent batch tiles -> shardable across v7x's 2 TensorCores.
            dimension_semantics=("parallel",),
            # Above v5e's 16 MiB scoped default, headroom within v7x's 64 MiB.
            vmem_limit_bytes=48 << 20,
        ),
    )(ctx, w_t, b2)
    return out[:B]


if __name__ == "__main__":
    # Small but grid-exercising sizes consistent with the module's forward.
    vocab_size = 512      # V (multiple of 128 -> lane-dense stores)
    embedding_dim = 128   # D
    batch = 512           # B (two 256-row batch tiles -> grid of 2)
    context = 4           # C (CBOW context window)

    key = jax.random.PRNGKey(0)
    k_emb, k_w, k_b, k_ids = jax.random.split(key, 4)

    emb_table = jax.random.normal(k_emb, (vocab_size, embedding_dim), jnp.float32)
    bound = 1.0 / (embedding_dim ** 0.5)
    lin_w = jax.random.uniform(k_w, (vocab_size, embedding_dim), jnp.float32,
                               minval=-bound, maxval=bound)
    lin_b = jax.random.uniform(k_b, (vocab_size,), jnp.float32,
                               minval=-bound, maxval=bound)
    token_ids = jax.random.randint(k_ids, (batch, context), 0, vocab_size, jnp.int32)

    # Parameter layout prep happens once (cache across steps in real use).
    w_t, b2 = prepare_cbow_params(lin_w, lin_b)

    fwd = jax.jit(lambda ids, emb, w, b: cbow_forward(ids, emb, w, b, block_b=256))
    log_probs = jax.block_until_ready(fwd(token_ids, emb_table, w_t, b2))
    assert log_probs.shape == (batch, vocab_size)

    # Matched-precision reference (same bf16 activation/weight path as the kernel).
    ctx_mean = jnp.take(emb_table, token_ids, axis=0).mean(axis=1)
    w_bf = lin_w.T.astype(jnp.bfloat16).astype(jnp.float32)
    ref_logits = ctx_mean.astype(jnp.bfloat16).astype(jnp.float32) @ w_bf + lin_b
    ref_matched = jax.nn.log_softmax(ref_logits, axis=1)
    assert jnp.allclose(log_probs, ref_matched, atol=2e-3, rtol=2e-3)

    # Loose semantic check against the pure-f32 PyTorch math
    # (mean -> linear -> log_softmax); difference is bf16 rounding only.
    ref_f32 = jax.nn.log_softmax(ctx_mean @ lin_w.T + lin_b, axis=1)
    assert jnp.allclose(log_probs, ref_f32, atol=5e-2)

    print("KERNEL_OK")
</pallas_src>

<mosaic_0001>
module attributes {stable_mosaic.version = 11 : i64} {
  func.func @cbow_kernel(%arg0: i32, %arg1: memref<256x128xbf16, #tpu.memory_space<vmem>>, %arg2: memref<128x512xbf16, #tpu.memory_space<vmem>>, %arg3: memref<1x512xf32, #tpu.memory_space<vmem>>, %arg4: memref<256x512xf32, #tpu.memory_space<vmem>>) attributes {dimension_semantics = [#tpu.dimension_semantics<parallel>], iteration_bounds = array<i64: 2>, scalar_prefetch = 0 : i64, scratch_operands = 0 : i64, tpu.core_type = #tpu.core_type<tc>, window_params = [{transform_indices = @transform_0, window_bounds = array<i64: 256, 128>}, {pipeline_mode = #tpu.pipeline_mode<synchronous>, transform_indices = @transform_1, window_bounds = array<i64: 128, 512>}, {pipeline_mode = #tpu.pipeline_mode<synchronous>, transform_indices = @transform_2, window_bounds = array<i64: 1, 512>}, {transform_indices = @transform_3, window_bounds = array<i64: 256, 512>}]} {
    %c0 = arith.constant 0 : index
    %c0_0 = arith.constant 0 : index
    %0 = vector.load %arg1[%c0, %c0_0] : memref<256x128xbf16, #tpu.memory_space<vmem>>, vector<256x128xbf16>
    %c0_1 = arith.constant 0 : index
    %c0_2 = arith.constant 0 : index
    %1 = vector.load %arg2[%c0_1, %c0_2] : memref<128x512xbf16, #tpu.memory_space<vmem>>, vector<128x512xbf16>
    %cst = arith.constant dense<0.000000e+00> : vector<256x512xf32>
    %2 = tpu.matmul %0, %1, %cst {dimension_numbers = #tpu.dot_dimension_numbers<[1], [0], [0], [1], [0, 0, 1, 1], [], []>} : vector<256x128xbf16>, vector<128x512xbf16>, vector<256x512xf32> -> vector<256x512xf32>
    %c0_3 = arith.constant 0 : index
    %c0_4 = arith.constant 0 : index
    %3 = vector.load %arg3[%c0_3, %c0_4] : memref<1x512xf32, #tpu.memory_space<vmem>>, vector<1x512xf32>
    %4 = vector.broadcast %3 : vector<1x512xf32> to vector<256x512xf32>
    %5 = arith.addf %2, %4 : vector<256x512xf32>
    %cst_5 = arith.constant dense<0xFF800000> : vector<256xf32>
    %6 = vector.multi_reduction <maximumf>, %5, %cst_5 [1] : vector<256x512xf32> to vector<256xf32>
    %7 = vector.shape_cast %6 : vector<256xf32> to vector<256x1xf32>
    %8 = vector.broadcast %7 : vector<256x1xf32> to vector<256x512xf32>
    %9 = arith.subf %5, %8 : vector<256x512xf32>
    %10 = math.exp %9 : vector<256x512xf32>
    %cst_6 = arith.constant dense<0.000000e+00> : vector<256xf32>
    %11 = vector.multi_reduction <add>, %10, %cst_6 [1] : vector<256x512xf32> to vector<256xf32>
    %12 = vector.shape_cast %11 : vector<256xf32> to vector<256x1xf32>
    %13 = math.log %12 : vector<256x1xf32>
    %14 = vector.broadcast %13 : vector<256x1xf32> to vector<256x512xf32>
    %15 = arith.subf %9, %14 : vector<256x512xf32>
    %c0_7 = arith.constant 0 : index
    %c0_8 = arith.constant 0 : index
    %16 = vector.load %arg4[%c0_7, %c0_8] : memref<256x512xf32, #tpu.memory_space<vmem>>, vector<256x512xf32>
    tpu.vector_store %arg4[%c0_7, %c0_8], %15 {strides = array<i32>} : memref<256x512xf32, #tpu.memory_space<vmem>>, vector<256x512xf32>,
    return
  }
  func.func @transform_0(%arg0: i32) -> (i32, i32) {
    %c0_i32 = arith.constant 0 : i32
    %c0_i32_0 = arith.constant 0 : i32
    return %arg0, %c0_i32 : i32, i32
  }
  func.func @transform_1(%arg0: i32) -> (i32, i32) {
    %c0_i32 = arith.constant 0 : i32
    %c0_i32_0 = arith.constant 0 : i32
    %c0_i32_1 = arith.constant 0 : i32
    return %c0_i32, %c0_i32_0 : i32, i32
  }
  func.func @transform_2(%arg0: i32) -> (i32, i32) {
    %c0_i32 = arith.constant 0 : i32
    %c0_i32_0 = arith.constant 0 : i32
    %c0_i32_1 = arith.constant 0 : i32
    return %c0_i32, %c0_i32_0 : i32, i32
  }
  func.func @transform_3(%arg0: i32) -> (i32, i32) {
    %c0_i32 = arith.constant 0 : i32
    %c0_i32_0 = arith.constant 0 : i32
    return %arg0, %c0_i32 : i32, i32
  }
}

</mosaic_0001>

<llo_original>
// kernel: _lambda_.1
$region0: #{_lambda_.1}
  #allocation0 [shape = 'u32[]', space=smem, size = 0x4, offset = 0x4, fixed_abs, tag = 'smem constant byte address 0x4 - core index']
  #allocation1 [shape = 'u32[144,128]{1,0:T(1,128)}', space=vmem, size = 0x12000, scoped, tag = 'internal scratch']
  %s0 = inlined_call_operand.vmem [shape: bf16[512,128], index: 0, kind: input, shape index: {}]
  %s1 = inlined_call_operand.vmem [shape: bf16[128,512], index: 1, kind: input, shape index: {}]
  %s2 = inlined_call_operand.vmem [shape: f32[1,512], index: 2, kind: input, shape index: {}]
  %s3 = inlined_call_operand.hbm [shape: f32[512,512], index: 3, kind: output, shape index: {}]
  %s4 = sld [smem:[#allocation0]]
  $region45: #{_lambda_.1} parent=0
    _
  %s6 = ssub.s32 1, %s4
  %s7 = scalar_select 0, %s6, %s4
  $region1: #{_lambda_.1} parent=0
    #allocation2 [shape = 'u8[1048576]{0}', space=vmem, size = 0x100000, scoped, tag = 'output window, operand 0']
    #allocation3 [shape = 's32[2]{0}', space=sflag, size = 0x8, scoped, tag = 'scoped memory for _lambda_.1']
    %8 = vsyncpa [#allocation3], 0
    %s9 = scalar_lea.sflag [#allocation3], 1
    %10 = vsyncpa %s9, 0
    loop: start=0, step=1, limit=4
    $region2: #{_lambda_.1} parent=1 // loop_pre_header
      _
    $region3: #{_lambda_.1} parent=1 // loop_header
      %s12 = sphi 0, %s16
      %p13 = scmp.ge.s32.totalorder %s12, 4
      %s22 = sphi 0, %s24
      %s25 = sphi 0, %s22
      %s26 = sphi 0, %s25
      %s42 = sphi 0, %s26
      %s46 = sphi 0, %s46
      %s48 = sphi 0, %s46
      %s49 = sphi 0, %s48
      %s63 = sphi 0, %s49
      %s67 = sphi 0, %s67
      %s69 = sphi 0, %s67
      %s70 = sphi 0, %s69
      %s84 = sphi 0, %s70
      %s90 = sphi 0, %s92
      %s93 = sphi 0, %s90
      %s94 = sphi 0, %s93
      %s110 = sphi 0, %s94
    $region4: #{_lambda_.1} parent=1 // loop_header_branch
      %15 = sbr.rel (%p13) target = $region8
    $region5: #{_lambda_.1} parent=1 // loop_body
      %s17 = ssub.s32 %s12, 1
      %s18 = ssub.s32 %s12, 2
      %s19 = sadd.s32 %s12, 1
      %s20 = ssub.s32 %s12, %s19
      %p21 = scmp.eq.s32.totalorder %s20, 0
      %s23 = sadd.s32 %s22, 1
      %s24 = scalar_select %p21, %s22, %s23
      %p27 = pneg %p21
      %p28 = scmp.eq.s32.totalorder %s12, 1
      %p29 = por %p27, %p28
      %p30 = scmp.ne.s32.totalorder %s22, %s25
      %p31 = scmp.eq.s32.totalorder %s12, 0
      %p32 = por %p30, %p31
      %p33 = scmp.ne.s32.totalorder %s22, %s25
      %p34 = scmp.eq.s32.totalorder %s17, 1
      %p35 = por %p33, %p34
      %p36 = scmp.ne.s32.totalorder %s25, %s26
      %p37 = scmp.eq.s32.totalorder %s17, 0
      %p38 = por %p36, %p37
      %p39 = scmp.ne.s32.totalorder %s25, %s26
      %p40 = scmp.eq.s32.totalorder %s18, 1
      %p41 = por %p39, %p40
      %p43 = scmp.ne.s32.totalorder %s26, %s42
      %p44 = scmp.eq.s32.totalorder %s18, 0
      %p45 = por %p43, %p44
      %s47 = sadd.s32 %s46, 1
      %p50 = scmp.eq.s32.totalorder %s12, 1
      %p51 = scmp.ne.s32.totalorder %s46, %s48
      %p52 = scmp.eq.s32.totalorder %s12, 0
      %p53 = por %p51, %p52
      %p54 = scmp.ne.s32.totalorder %s46, %s48
      %p55 = scmp.eq.s32.totalorder %s17, 1
      %p56 = por %p54, %p55
      %p57 = scmp.ne.s32.totalorder %s48, %s49
      %p58 = scmp.eq.s32.totalorder %s17, 0
      %p59 = por %p57, %p58
      %p60 = scmp.ne.s32.totalorder %s48, %s49
      %p61 = scmp.eq.s32.totalorder %s18, 1
      %p62 = por %p60, %p61
      %p64 = scmp.ne.s32.totalorder %s49, %s63
      %p65 = scmp.eq.s32.totalorder %s18, 0
      %p66 = por %p64, %p65
      %s68 = sadd.s32 %s67, 1
      %p71 = scmp.eq.s32.totalorder %s12, 1
      %p72 = scmp.ne.s32.totalorder %s67, %s69
      %p73 = scmp.eq.s32.totalorder %s12, 0
      %p74 = por %p72, %p73
      %p75 = scmp.ne.s32.totalorder %s67, %s69
      %p76 = scmp.eq.s32.totalorder %s17, 1
      %p77 = por %p75, %p76
      %p78 = scmp.ne.s32.totalorder %s69, %s70
      %p79 = scmp.eq.s32.totalorder %s17, 0
      %p80 = por %p78, %p79
      %p81 = scmp.ne.s32.totalorder %s69, %s70
      %p82 = scmp.eq.s32.totalorder %s18, 1
      %p83 = por %p81, %p82
      %p85 = scmp.ne.s32.totalorder %s70, %s84
      %p86 = scmp.eq.s32.totalorder %s18, 0
      %p87 = por %p85, %p86
      %s88 = ssub.s32 %s12, %s19
      %p89 = scmp.eq.s32.totalorder %s88, 0
      %s91 = sadd.s32 %s90, 1
      %s92 = scalar_select %p89, %s90, %s91
      %p95 = pneg %p89
      %p96 = scmp.eq.s32.totalorder %s12, 1
      %p97 = por %p95, %p96
      %p98 = scmp.ne.s32.totalorder %s90, %s93
      %p99 = scmp.eq.s32.totalorder %s12, 0
      %p100 = por %p98, %p99
      %p101 = scmp.ne.s32.totalorder %s90, %s93
      %p102 = scmp.eq.s32.totalorder %s17, 1
      %p103 = por %p101, %p102
      %p104 = scmp.ne.s32.totalorder %s93, %s94
      %p105 = scmp.eq.s32.totalorder %s17, 0
      %p106 = por %p104, %p105
      %p107 = scmp.ne.s32.totalorder %s93, %s94
      %p108 = scmp.eq.s32.totalorder %s18, 1
      %p109 = por %p107, %p108
      %p111 = scmp.ne.s32.totalorder %s94, %s110
      %p112 = scmp.eq.s32.totalorder %s18, 0
      %p113 = por %p111, %p112
      %p114 = scmp.le.s32.totalorder 1, %s12
      %p115 = scmp.lt.s32.totalorder %s12, 3
      %p116 = pnand %p114, %p115
      %p117 = pneg %p116
      // Predicated region
      $region9: #{_lambda_.1} parent=5 // pred_check
        _
      $region10: #{_lambda_.1} parent=5 // pred_check_branch
        %119 = sbr.rel (%p116) target = $region12
      $region11: #{_lambda_.1} parent=5 // pred_region
        %s120 = ssub.s32 %s12, 1
        // Predicated region
        $region13: #{_lambda_.1} parent=11 // pred_check
          %p121 = pneg %p59
        $region14: #{_lambda_.1} parent=11 // pred_check_branch
          %123 = sbr.rel (%p121) target = $region16
        $region15: #{_lambda_.1} parent=11 // pred_region
          _
        $region16: #{_lambda_.1} parent=11 // pred_fallthru
          _
        // Predicated region
        $region17: #{_lambda_.1} parent=11 // pred_check
          %p124 = pneg %p80
        $region18: #{_lambda_.1} parent=11 // pred_check_branch
          %126 = sbr.rel (%p124) target = $region20
        $region19: #{_lambda_.1} parent=11 // pred_region
          _
        $region20: #{_lambda_.1} parent=11 // pred_fallthru
          _
      $region12: #{_lambda_.1} parent=5 // pred_fallthru
        _
      %p127 = scmp.lt.s32.totalorder %s12, 2
      // Predicated region
      $region21: #{_lambda_.1} parent=5 // pred_check
        %p128 = pneg %p127
      $region22: #{_lambda_.1} parent=5 // pred_check_branch
        %130 = sbr.rel (%p128) target = $region24
      $region23: #{_lambda_.1} parent=5 // pred_region
        // Predicated region
        $region25: #{_lambda_.1} parent=23 // pred_check
          %p131 = pneg %p32
        $region26: #{_lambda_.1} parent=23 // pred_check_branch
          %133 = sbr.rel (%p131) target = $region28
        $region27: #{_lambda_.1} parent=23 // pred_region
          %s134 = smul.u32 32, %s12
          %p135 = scmp.lt.s32.totalorder %s134, 63
          %s136 = scalar_select %p135, %s134, 63
          %s137 = smul.addr %s136, 4
          %s138 = scalar_lea.vmem %s0, %s137
          %s139 = smul.u32 32, %s12
        $region28: #{_lambda_.1} parent=23 // pred_fallthru
          _
      $region24: #{_lambda_.1} parent=5 // pred_fallthru
        _
      %p140 = scmp.le.s32.totalorder 1, %s12
      %p141 = scmp.lt.s32.totalorder %s12, 3
      %p142 = pnand %p140, %p141
      %p143 = pneg %p142
      // Predicated region
      $region29: #{_lambda_.1} parent=5 // pred_check
        _
      $region30: #{_lambda_.1} parent=5 // pred_check_branch
        %145 = sbr.rel (%p142) target = $region32
      $region31: #{_lambda_.1} parent=5 // pred_region
        %s146 = ssub.s32 %s12, 1
        %s147 = smul.u32 32, %s17
        %p148 = scmp.lt.s32.totalorder %s147, 63
        %s149 = scalar_select %p148, %s147, 63
        %s150 = smul.addr %s149, 4
        %s151 = scalar_lea.vmem %s0, %s150
        %p152 = pneg %p38
        %p153 = pneg %p35
        %p154 = pneg %p59
        %p155 = pneg %p56
        %p156 = pneg %p80
        %p157 = pneg %p77
        %p158 = pneg %p106
        %p159 = pneg %p103
        %s160 = sand.u32 %s93, 1
        %s161 = scalar_lea.sflag [#allocation3], %s160
        %s162 = sand.u32 %s93, 1
        %s163 = smul.addr %s162, 1024
        %s164 = scalar_lea.vmem [#allocation2], %s163
        %s165 = smul.u32 32, %s17
        %p166 = scmp.lt.s32.totalorder %s165, 63
        %s167 = scalar_select %p166, %s165, 63
        %s168 = smul.addr %s167, 4
        %s169 = scalar_lea.vmem %s0, %s168
        %s170 = smul.u32 32, %s17
        %s171 = smul.u32 32, %s17
        %v173 = vld [vmem:[%s169] sm:$0xf]
        %v174 = vld [vmem:[%s169 + $0x4] sm:$0xf]
        %v175 = vld [vmem:[%s169 + $0x8] sm:$0xf]
        %v176 = vld [vmem:[%s169 + $0xc] sm:$0xf]
        %v177 = vld [vmem:[%s169 + $0x10] sm:$0xf]
        %v178 = vld [vmem:[%s169 + $0x14] sm:$0xf]
        %v179 = vld [vmem:[%s169 + $0x18] sm:$0xf]
        %v180 = vld [vmem:[%s169 + $0x1c] sm:$0xf]
        %v181 = vld [vmem:[%s169 + $0x20] sm:$0xf]
        %v182 = vld [vmem:[%s169 + $0x24] sm:$0xf]
        %v183 = vld [vmem:[%s169 + $0x28] sm:$0xf]
        %v184 = vld [vmem:[%s169 + $0x2c] sm:$0xf]
        %v185 = vld [vmem:[%s169 + $0x30] sm:$0xf]
        %v186 = vld [vmem:[%s169 + $0x34] sm:$0xf]
        %v187 = vld [vmem:[%s169 + $0x38] sm:$0xf]
        %v188 = vld [vmem:[%s169 + $0x3c] sm:$0xf]
        %v189 = vld [vmem:[%s169 + $0x40] sm:$0xf]
        %v190 = vld [vmem:[%s169 + $0x44] sm:$0xf]
        %v191 = vld [vmem:[%s169 + $0x48] sm:$0xf]
        %v192 = vld [vmem:[%s169 + $0x4c] sm:$0xf]
        %v193 = vld [vmem:[%s169 + $0x50] sm:$0xf]
        %v194 = vld [vmem:[%s169 + $0x54] sm:$0xf]
        %v195 = vld [vmem:[%s169 + $0x58] sm:$0xf]
        %v196 = vld [vmem:[%s169 + $0x5c] sm:$0xf]
        %v197 = vld [vmem:[%s169 + $0x60] sm:$0xf]
        %v198 = vld [vmem:[%s169 + $0x64] sm:$0xf]
        %v199 = vld [vmem:[%s169 + $0x68] sm:$0xf]
        %v200 = vld [vmem:[%s169 + $0x6c] sm:$0xf]
        %v201 = vld [vmem:[%s169 + $0x70] sm:$0xf]
        %v202 = vld [vmem:[%s169 + $0x74] sm:$0xf]
        %v203 = vld [vmem:[%s169 + $0x78] sm:$0xf]
        %v204 = vld [vmem:[%s169 + $0x7c] sm:$0xf]
        %v205 = vld [vmem:[%s1] sm:$0xff]
        %v206 = vld [vmem:[%s1 + $0x8] sm:$0xff]
        %v207 = vld [vmem:[%s1 + $0x10] sm:$0xff]
        %v208 = vld [vmem:[%s1 + $0x18] sm:$0xff]
        %v209 = vld [vmem:[%s1 + $0x20] sm:$0xff]
        %v210 = vld [vmem:[%s1 + $0x28] sm:$0xff]
        %v211 = vld [vmem:[%s1 + $0x30] sm:$0xff]
        %v212 = vld [vmem:[%s1 + $0x38] sm:$0xff]
        %v213 = vld [vmem:[%s1 + $0x40] sm:$0xff]
        %v214 = vld [vmem:[%s1 + $0x48] sm:$0xff]
        %v215 = vld [vmem:[%s1 + $0x50] sm:$0xff]
        %v216 = vld [vmem:[%s1 + $0x58] sm:$0xff]
        %v217 = vld [vmem:[%s1 + $0x60] sm:$0xff]
        %v218 = vld [vmem:[%s1 + $0x68] sm:$0xff]
        %v219 = vld [vmem:[%s1 + $0x70] sm:$0xff]
        %v220 = vld [vmem:[%s1 + $0x78] sm:$0xff]
        %v221 = vld [vmem:[%s1 + $0x80] sm:$0xff]
        %v222 = vld [vmem:[%s1 + $0x88] sm:$0xff]
        %v223 = vld [vmem:[%s1 + $0x90] sm:$0xff]
        %v224 = vld [vmem:[%s1 + $0x98] sm:$0xff]
        %v225 = vld [vmem:[%s1 + $0xa0] sm:$0xff]
        %v226 = vld [vmem:[%s1 + $0xa8] sm:$0xff]
        %v227 = vld [vmem:[%s1 + $0xb0] sm:$0xff]
        %v228 = vld [vmem:[%s1 + $0xb8] sm:$0xff]
        %v229 = vld [vmem:[%s1 + $0xc0] sm:$0xff]
        %v230 = vld [vmem:[%s1 + $0xc8] sm:$0xff]
        %v231 = vld [vmem:[%s1 + $0xd0] sm:$0xff]
        %v232 = vld [vmem:[%s1 + $0xd8] sm:$0xff]
        %v233 = vld [vmem:[%s1 + $0xe0] sm:$0xff]
        %v234 = vld [vmem:[%s1 + $0xe8] sm:$0xff]
        %v235 = vld [vmem:[%s1 + $0xf0] sm:$0xff]
        %v236 = vld [vmem:[%s1 + $0xf8] sm:$0xff]
        %v237 = vld [vmem:[%s2] sm:$0xf]
        %v239 = vlaneseq
        %v240 = vshrl.u32 %v239, 7
        %v241 = vsub.s32 0, %v240
        %v242 = vrot.slane %v237, %v241
        %v243 = vlaneseq
        %v244 = vshrl.u32 %v243, 7
        %v245 = vsub.s32 1, %v244
        %v246 = vrot.slane %v237, %v245
        %v247 = vlaneseq
        %v248 = vshrl.u32 %v247, 7
        %v249 = vsub.s32 2, %v248
        %v250 = vrot.slane %v237, %v249
        %v251 = vlaneseq
        %v252 = vshrl.u32 %v251, 7
        %v253 = vsub.s32 3, %v252
        %v254 = vrot.slane %v237, %v253
        %v291 = vunpack.c.l.b16 %v173
        %v292 = vunpack.c.l.b16 %v174
        %v293 = vunpack.c.l.b16 %v175
        %v294 = vunpack.c.l.b16 %v176
        %v295 = vunpack.c.l.b16 %v177
        %v296 = vunpack.c.l.b16 %v178
        %v297 = vunpack.c.l.b16 %v179
        %v298 = vunpack.c.l.b16 %v180
        %v299 = vunpack.c.l.b16 %v181
        %v300 = vunpack.c.l.b16 %v182
        %v301 = vunpack.c.l.b16 %v183
        %v302 = vunpack.c.l.b16 %v184
        %v303 = vunpack.c.l.b16 %v185
        %v304 = vunpack.c.l.b16 %v186
        %v305 = vunpack.c.l.b16 %v187
        %v306 = vunpack.c.l.b16 %v188
        %v307 = vunpack.c.l.b16 %v189
        %v308 = vunpack.c.l.b16 %v190
        %v309 = vunpack.c.l.b16 %v191
        %v310 = vunpack.c.l.b16 %v192
        %v311 = vunpack.c.l.b16 %v193
        %v312 = vunpack.c.l.b16 %v194
        %v313 = vunpack.c.l.b16 %v195
        %v314 = vunpack.c.l.b16 %v196
        %v315 = vunpack.c.l.b16 %v197
        %v316 = vunpack.c.l.b16 %v198
        %v317 = vunpack.c.l.b16 %v199
        %v318 = vunpack.c.l.b16 %v200
        %v319 = vunpack.c.l.b16 %v201
        %v320 = vunpack.c.l.b16 %v202
        %v321 = vunpack.c.l.b16 %v203
        %v322 = vunpack.c.l.b16 %v204
        %v323 = vpack.c.b16 %v292, %v291
        %v324 = vpack.c.b16 %v294, %v293
        %v325 = vpack.c.b16 %v296, %v295
        %v326 = vpack.c.b16 %v298, %v297
        %v327 = vpack.c.b16 %v300, %v299
        %v328 = vpack.c.b16 %v302, %v301
        %v329 = vpack.c.b16 %v304, %v303
        %v330 = vpack.c.b16 %v306, %v305
        %v331 = vpack.c.b16 %v308, %v307
        %v332 = vpack.c.b16 %v310, %v309
        %v333 = vpack.c.b16 %v312, %v311
        %v334 = vpack.c.b16 %v314, %v313
        %v335 = vpack.c.b16 %v316, %v315
        %v336 = vpack.c.b16 %v318, %v317
        %v337 = vpack.c.b16 %v320, %v319
        %v338 = vpack.c.b16 %v322, %v321
        %v387 = vunpack.c.l.b16 %v205
        %v388 = vunpack.c.h.b16 %v205
        %v389 = vunpack.c.l.b16 %v206
        %v390 = vunpack.c.h.b16 %v206
        %v391 = vunpack.c.l.b16 %v207
        %v392 = vunpack.c.h.b16 %v207
        %v393 = vunpack.c.l.b16 %v208
        %v394 = vunpack.c.h.b16 %v208
        %v395 = vunpack.c.l.b16 %v209
        %v396 = vunpack.c.h.b16 %v209
        %v397 = vunpack.c.l.b16 %v210
        %v398 = vunpack.c.h.b16 %v210
        %v399 = vunpack.c.l.b16 %v211
        %v400 = vunpack.c.h.b16 %v211
        %v401 = vunpack.c.l.b16 %v212
        %v402 = vunpack.c.h.b16 %v212
        %v403 = vunpack.c.l.b16 %v213
        %v404 = vunpack.c.h.b16 %v213
        %v405 = vunpack.c.l.b16 %v214
        %v406 = vunpack.c.h.b16 %v214
        %v407 = vunpack.c.l.b16 %v215
        %v408 = vunpack.c.h.b16 %v215
        %v409 = vunpack.c.l.b16 %v216
        %v410 = vunpack.c.h.b16 %v216
        %v411 = vunpack.c.l.b16 %v217
        %v412 = vunpack.c.h.b16 %v217
        %v413 = vunpack.c.l.b16 %v218
        %v414 = vunpack.c.h.b16 %v218
        %v415 = vunpack.c.l.b16 %v219
        %v416 = vunpack.c.h.b16 %v219
        %v417 = vunpack.c.l.b16 %v220
        %v418 = vunpack.c.h.b16 %v220
        %v419 = vunpack.c.l.b16 %v221
        %v420 = vunpack.c.h.b16 %v221
        %v421 = vunpack.c.l.b16 %v222
        %v422 = vunpack.c.h.b16 %v222
        %v423 = vunpack.c.l.b16 %v223
        %v424 = vunpack.c.h.b16 %v223
        %v425 = vunpack.c.l.b16 %v224
        %v426 = vunpack.c.h.b16 %v224
        %v427 = vunpack.c.l.b16 %v225
        %v428 = vunpack.c.h.b16 %v225
        %v429 = vunpack.c.l.b16 %v226
        %v430 = vunpack.c.h.b16 %v226
        %v431 = vunpack.c.l.b16 %v227
        %v432 = vunpack.c.h.b16 %v227
        %v433 = vunpack.c.l.b16 %v228
        %v434 = vunpack.c.h.b16 %v228
        %v435 = vunpack.c.l.b16 %v229
        %v436 = vunpack.c.h.b16 %v229
        %v437 = vunpack.c.l.b16 %v230
        %v438 = vunpack.c.h.b16 %v230
        %v439 = vunpack.c.l.b16 %v231
        %v440 = vunpack.c.h.b16 %v231
        %v441 = vunpack.c.l.b16 %v232
        %v442 = vunpack.c.h.b16 %v232
        %v443 = vunpack.c.l.b16 %v233
        %v444 = vunpack.c.h.b16 %v233
        %v445 = vunpack.c.l.b16 %v234
        %v446 = vunpack.c.h.b16 %v234
        %v447 = vunpack.c.l.b16 %v235
        %v448 = vunpack.c.h.b16 %v235
        %v449 = vunpack.c.l.b16 %v236
        %v450 = vunpack.c.h.b16 %v236
        %v451 = vpack.c.b16 %v391, %v387
        %v452 = vpack.c.b16 %v392, %v388
        %v453 = vpack.c.b16 %v393, %v389
        %v454 = vpack.c.b16 %v394, %v390
        %v455 = vpack.c.b16 %v399, %v395
        %v456 = vpack.c.b16 %v400, %v396
        %v457 = vpack.c.b16 %v401, %v397
        %v458 = vpack.c.b16 %v402, %v398
        %v459 = vpack.c.b16 %v407, %v403
        %v460 = vpack.c.b16 %v408, %v404
        %v461 = vpack.c.b16 %v409, %v405
        %v462 = vpack.c.b16 %v410, %v406
        %v463 = vpack.c.b16 %v415, %v411
        %v464 = vpack.c.b16 %v416, %v412
        %v465 = vpack.c.b16 %v417, %v413
        %v466 = vpack.c.b16 %v418, %v414
        %v467 = vpack.c.b16 %v423, %v419
        %v468 = vpack.c.b16 %v424, %v420
        %v469 = vpack.c.b16 %v425, %v421
        %v470 = vpack.c.b16 %v426, %v422
        %v471 = vpack.c.b16 %v431, %v427
        %v472 = vpack.c.b16 %v432, %v428
        %v473 = vpack.c.b16 %v433, %v429
        %v474 = vpack.c.b16 %v434, %v430
        %v475 = vpack.c.b16 %v439, %v435
        %v476 = vpack.c.b16 %v440, %v436
        %v477 = vpack.c.b16 %v441, %v437
        %v478 = vpack.c.b16 %v442, %v438
        %v479 = vpack.c.b16 %v447, %v443
        %v480 = vpack.c.b16 %v448, %v444
        %v481 = vpack.c.b16 %v449, %v445
        %v482 = vpack.c.b16 %v450, %v446
        %515 = vmatprep.subr.bf16.mxu0 %v480
        %516 = vmatpush1.bf16.msra.mxu0 %v479
        %517 = vmatprep.subr.bf16.mxu0 %v476
        %518 = vmatpush1.bf16.msra.mxu0 %v475
        %519 = vmatprep.subr.bf16.mxu0 %v472
        %520 = vmatpush1.bf16.msra.mxu0 %v471
        %521 = vmatprep.subr.bf16.mxu0 %v468
        %522 = vmatpush1.bf16.msra.mxu0 %v467
        %523 = vmatprep.subr.bf16.mxu0 %v464
        %524 = vmatpush1.bf16.msra.mxu0 %v463
        %525 = vmatprep.subr.bf16.mxu0 %v460
        %526 = vmatpush1.bf16.msra.mxu0 %v459
        %527 = vmatprep.subr.bf16.mxu0 %v456
        %528 = vmatpush1.bf16.msra.mxu0 %v455
        %529 = vmatprep.subr.bf16.mxu0 %v452
        %530 = vmatpush1.bf16.msra.mxu0 %v451
        %531 = vmatprep.subr.bf16.mxu0 0
        %532 = vmatpush2.bf16.msra.mxu0 0
        %533 = vmatprep.subr.bf16.mxu0 0
        %534 = vmatpush2.bf16.msra.mxu0 0
        %535 = vmatprep.subr.bf16.mxu0 0
        %536 = vmatpush2.bf16.msra.mxu0 0
        %537 = vmatprep.subr.bf16.mxu0 0
        %538 = vmatpush2.bf16.msra.mxu0 0
        %539 = vmatprep.subr.bf16.mxu0 0
        %540 = vmatpush2.bf16.msra.mxu0 0
        %541 = vmatprep.subr.bf16.mxu0 0
        %542 = vmatpush2.bf16.msra.mxu0 0
        %543 = vmatprep.subr.bf16.mxu0 0
        %544 = vmatpush2.bf16.msra.mxu0 0
        %545 = vmatprep.subr.bf16.mxu0 0
        %546 = vmatpush2.bf16.msra.mxu0 0
        %547 = vmatprep.mubr.bf16.mxu0 0
        %548 = vmatmul.mubr.bf16.gmra.mxu0 %v323
        %v549 = vpop.f32.mrf.mxu0
        %v550 = vadd.f32 %v242, %v549
        %v551 = vpop.f32.mrf.mxu0
        %v552 = vadd.f32 %v246, %v551
        %v553 = vpop.f32.mrf.mxu0
        %v554 = vadd.f32 %v242, %v553
        %v555 = vpop.f32.mrf.mxu0
        %v556 = vadd.f32 %v246, %v555
        %557 = vmatprep.mubr.bf16.mxu0 0
        %558 = vmatmul.mubr.bf16.gmra.mxu0 %v324
        %v559 = vpop.f32.mrf.mxu0
        %v560 = vadd.f32 %v242, %v559
        %v561 = vpop.f32.mrf.mxu0
        %v562 = vadd.f32 %v246, %v561
        %v563 = vpop.f32.mrf.mxu0
        %v564 = vadd.f32 %v242, %v563
        %v565 = vpop.f32.mrf.mxu0
        %v566 = vadd.f32 %v246, %v565
        %567 = vmatprep.mubr.bf16.mxu0 0
        %568 = vmatmul.mubr.bf16.gmra.mxu0 %v325
        %v569 = vpop.f32.mrf.mxu0
        %v570 = vadd.f32 %v242, %v569
        %v571 = vpop.f32.mrf.mxu0
        %v572 = vadd.f32 %v246, %v571
        %v573 = vpop.f32.mrf.mxu0
        %v574 = vadd.f32 %v242, %v573
        %v575 = vpop.f32.mrf.mxu0
        %v576 = vadd.f32 %v246, %v575
        %577 = vmatprep.mubr.bf16.mxu0 0
        %578 = vmatmul.mubr.bf16.gmra.mxu0 %v326
        %v579 = vpop.f32.mrf.mxu0
        %v580 = vadd.f32 %v242, %v579
        %v581 = vpop.f32.mrf.mxu0
        %v582 = vadd.f32 %v246, %v581
        %v583 = vpop.f32.mrf.mxu0
        %v584 = vadd.f32 %v242, %v583
        %v585 = vpop.f32.mrf.mxu0
        %v586 = vadd.f32 %v246, %v585
        %587 = vmatprep.mubr.bf16.mxu0 0
        %588 = vmatmul.mubr.bf16.gmra.mxu0 %v327
        %v589 = vpop.f32.mrf.mxu0
        %v590 = vadd.f32 %v242, %v589
        %v591 = vpop.f32.mrf.mxu0
        %v592 = vadd.f32 %v246, %v591
        %v593 = vpop.f32.mrf.mxu0
        %v594 = vadd.f32 %v242, %v593
        %v595 = vpop.f32.mrf.mxu0
        %v596 = vadd.f32 %v246, %v595
        %597 = vmatprep.mubr.bf16.mxu0 0
        %598 = vmatmul.mubr.bf16.gmra.mxu0 %v328
        %v599 = vpop.f32.mrf.mxu0
        %v600 = vadd.f32 %v242, %v599
        %v601 = vpop.f32.mrf.mxu0
        %v602 = vadd.f32 %v246, %v601
        %v603 = vpop.f32.mrf.mxu0
        %v604 = vadd.f32 %v242, %v603
        %v605 = vpop.f32.mrf.mxu0
        %v606 = vadd.f32 %v246, %v605
        %607 = vmatprep.mubr.bf16.mxu0 0
        %608 = vmatmul.mubr.bf16.gmra.mxu0 %v329
        %v609 = vpop.f32.mrf.mxu0
        %v610 = vadd.f32 %v242, %v609
        %v611 = vpop.f32.mrf.mxu0
        %v612 = vadd.f32 %v246, %v611
        %v613 = vpop.f32.mrf.mxu0
        %v614 = vadd.f32 %v242, %v613
        %v615 = vpop.f32.mrf.mxu0
        %v616 = vadd.f32 %v246, %v615
        %617 = vmatprep.mubr.bf16.mxu0 0
        %618 = vmatmul.mubr.bf16.gmra.mxu0 %v330
        %v619 = vpop.f32.mrf.mxu0
        %v620 = vadd.f32 %v242, %v619
        %v621 = vpop.f32.mrf.mxu0
        %v622 = vadd.f32 %v246, %v621
        %v623 = vpop.f32.mrf.mxu0
        %v624 = vadd.f32 %v242, %v623
        %v625 = vpop.f32.mrf.mxu0
        %v626 = vadd.f32 %v246, %v625
        %627 = vmatprep.mubr.bf16.mxu0 0
        %628 = vmatmul.mubr.bf16.gmra.mxu0 %v331
        %v629 = vpop.f32.mrf.mxu0
        %v630 = vadd.f32 %v242, %v629
        %v631 = vpop.f32.mrf.mxu0
        %v632 = vadd.f32 %v246, %v631
        %v633 = vpop.f32.mrf.mxu0
        %v634 = vadd.f32 %v242, %v633
        %v635 = vpop.f32.mrf.mxu0
        %v636 = vadd.f32 %v246, %v635
        %637 = vmatprep.mubr.bf16.mxu0 0
        %638 = vmatmul.mubr.bf16.gmra.mxu0 %v332
        %v639 = vpop.f32.mrf.mxu0
        %v640 = vadd.f32 %v242, %v639
        %v641 = vpop.f32.mrf.mxu0
        %v642 = vadd.f32 %v246, %v641
        %v643 = vpop.f32.mrf.mxu0
        %v644 = vadd.f32 %v242, %v643
        %v645 = vpop.f32.mrf.mxu0
        %v646 = vadd.f32 %v246, %v645
        %647 = vmatprep.mubr.bf16.mxu0 0
        %648 = vmatmul.mubr.bf16.gmra.mxu0 %v333
        %v649 = vpop.f32.mrf.mxu0
        %v650 = vadd.f32 %v242, %v649
        %v651 = vpop.f32.mrf.mxu0
        %v652 = vadd.f32 %v246, %v651
        %v653 = vpop.f32.mrf.mxu0
        %v654 = vadd.f32 %v242, %v653
        %v655 = vpop.f32.mrf.mxu0
        %v656 = vadd.f32 %v246, %v655
        %657 = vmatprep.mubr.bf16.mxu0 0
        %658 = vmatmul.mubr.bf16.gmra.mxu0 %v334
        %v659 = vpop.f32.mrf.mxu0
        %v660 = vadd.f32 %v242, %v659
        %v661 = vpop.f32.mrf.mxu0
        %v662 = vadd.f32 %v246, %v661
        %v663 = vpop.f32.mrf.mxu0
        %v664 = vadd.f32 %v242, %v663
        %v665 = vpop.f32.mrf.mxu0
        %v666 = vadd.f32 %v246, %v665
        %667 = vmatprep.mubr.bf16.mxu0 0
        %668 = vmatmul.mubr.bf16.gmra.mxu0 %v335
        %v669 = vpop.f32.mrf.mxu0
        %v670 = vadd.f32 %v242, %v669
        %v671 = vpop.f32.mrf.mxu0
        %v672 = vadd.f32 %v246, %v671
        %v673 = vpop.f32.mrf.mxu0
        %v674 = vadd.f32 %v242, %v673
        %v675 = vpop.f32.mrf.mxu0
        %v676 = vadd.f32 %v246, %v675
        %677 = vmatprep.mubr.bf16.mxu0 0
        %678 = vmatmul.mubr.bf16.gmra.mxu0 %v336
        %v679 = vpop.f32.mrf.mxu0
        %v680 = vadd.f32 %v242, %v679
        %v681 = vpop.f32.mrf.mxu0
        %v682 = vadd.f32 %v246, %v681
        %v683 = vpop.f32.mrf.mxu0
        %v684 = vadd.f32 %v242, %v683
        %v685 = vpop.f32.mrf.mxu0
        %v686 = vadd.f32 %v246, %v685
        %687 = vmatprep.mubr.bf16.mxu0 0
        %688 = vmatmul.mubr.bf16.gmra.mxu0 %v337
        %v689 = vpop.f32.mrf.mxu0
        %v690 = vadd.f32 %v242, %v689
        %v691 = vpop.f32.mrf.mxu0
        %v692 = vadd.f32 %v246, %v691
        %v693 = vpop.f32.mrf.mxu0
        %v694 = vadd.f32 %v242, %v693
        %v695 = vpop.f32.mrf.mxu0
        %v696 = vadd.f32 %v246, %v695
        %697 = vmatprep.mubr.bf16.mxu0 0
        %698 = vmatmul.mubr.bf16.gmra.mxu0 %v338
        %v699 = vpop.f32.mrf.mxu0
        %v700 = vadd.f32 %v242, %v699
        %v701 = vpop.f32.mrf.mxu0
        %v702 = vadd.f32 %v246, %v701
        %v703 = vpop.f32.mrf.mxu0
        %v704 = vadd.f32 %v242, %v703
        %v705 = vpop.f32.mrf.mxu0
        %v706 = vadd.f32 %v246, %v705
        %707 = vdwg.mxu0
        %708 = vmatprep.subr.bf16.mxu0 %v482
        %709 = vmatpush1.bf16.msra.mxu0 %v481
        %710 = vmatprep.subr.bf16.mxu0 %v478
        %711 = vmatpush1.bf16.msra.mxu0 %v477
        %712 = vmatprep.subr.bf16.mxu0 %v474
        %713 = vmatpush1.bf16.msra.mxu0 %v473
        %714 = vmatprep.subr.bf16.mxu0 %v470
        %715 = vmatpush1.bf16.msra.mxu0 %v469
        %716 = vmatprep.subr.bf16.mxu0 %v466
        %717 = vmatpush1.bf16.msra.mxu0 %v465
        %718 = vmatprep.subr.bf16.mxu0 %v462
        %719 = vmatpush1.bf16.msra.mxu0 %v461
        %720 = vmatprep.subr.bf16.mxu0 %v458
        %721 = vmatpush1.bf16.msra.mxu0 %v457
        %722 = vmatprep.subr.bf16.mxu0 %v454
        %723 = vmatpush1.bf16.msra.mxu0 %v453
        %724 = vmatprep.subr.bf16.mxu0 0
        %725 = vmatpush2.bf16.msra.mxu0 0
        %726 = vmatprep.subr.bf16.mxu0 0
        %727 = vmatpush2.bf16.msra.mxu0 0
        %728 = vmatprep.subr.bf16.mxu0 0
        %729 = vmatpush2.bf16.msra.mxu0 0
        %730 = vmatprep.subr.bf16.mxu0 0
        %731 = vmatpush2.bf16.msra.mxu0 0
        %732 = vmatprep.subr.bf16.mxu0 0
        %733 = vmatpush2.bf16.msra.mxu0 0
        %734 = vmatprep.subr.bf16.mxu0 0
        %735 = vmatpush2.bf16.msra.mxu0 0
        %736 = vmatprep.subr.bf16.mxu0 0
        %737 = vmatpush2.bf16.msra.mxu0 0
        %738 = vmatprep.subr.bf16.mxu0 0
        %739 = vmatpush2.bf16.msra.mxu0 0
        %740 = vmatprep.mubr.bf16.mxu0 0
        %741 = vmatmul.mubr.bf16.gmra.mxu0 %v323
        %v742 = vpop.f32.mrf.mxu0
        %v743 = vadd.f32 %v250, %v742
        %v744 = vpop.f32.mrf.mxu0
        %v745 = vadd.f32 %v254, %v744
        %v746 = vpop.f32.mrf.mxu0
        %v747 = vadd.f32 %v250, %v746
        %v748 = vpop.f32.mrf.mxu0
        %v749 = vadd.f32 %v254, %v748
        %750 = vmatprep.mubr.bf16.mxu0 0
        %751 = vmatmul.mubr.bf16.gmra.mxu0 %v324
        %v752 = vpop.f32.mrf.mxu0
        %v753 = vadd.f32 %v250, %v752
        %v754 = vpop.f32.mrf.mxu0
        %v755 = vadd.f32 %v254, %v754
        %v756 = vpop.f32.mrf.mxu0
        %v757 = vadd.f32 %v250, %v756
        %v758 = vpop.f32.mrf.mxu0
        %v759 = vadd.f32 %v254, %v758
        %760 = vmatprep.mubr.bf16.mxu0 0
        %761 = vmatmul.mubr.bf16.gmra.mxu0 %v325
        %v762 = vpop.f32.mrf.mxu0
        %v763 = vadd.f32 %v250, %v762
        %v764 = vpop.f32.mrf.mxu0
        %v765 = vadd.f32 %v254, %v764
        %v766 = vpop.f32.mrf.mxu0
        %v767 = vadd.f32 %v250, %v766
        %v768 = vpop.f32.mrf.mxu0
        %v769 = vadd.f32 %v254, %v768
        %770 = vmatprep.mubr.bf16.mxu0 0
        %771 = vmatmul.mubr.bf16.gmra.mxu0 %v326
        %v772 = vpop.f32.mrf.mxu0
        %v773 = vadd.f32 %v250, %v772
        %v774 = vpop.f32.mrf.mxu0
        %v775 = vadd.f32 %v254, %v774
        %v776 = vpop.f32.mrf.mxu0
        %v777 = vadd.f32 %v250, %v776
        %v778 = vpop.f32.mrf.mxu0
        %v779 = vadd.f32 %v254, %v778
        %780 = vmatprep.mubr.bf16.mxu0 0
        %781 = vmatmul.mubr.bf16.gmra.mxu0 %v327
        %v782 = vpop.f32.mrf.mxu0
        %v783 = vadd.f32 %v250, %v782
        %v784 = vpop.f32.mrf.mxu0
        %v785 = vadd.f32 %v254, %v784
        %v786 = vpop.f32.mrf.mxu0
        %v787 = vadd.f32 %v250, %v786
        %v788 = vpop.f32.mrf.mxu0
        %v789 = vadd.f32 %v254, %v788
        %790 = vmatprep.mubr.bf16.mxu0 0
        %791 = vmatmul.mubr.bf16.gmra.mxu0 %v328
        %v792 = vpop.f32.mrf.mxu0
        %v793 = vadd.f32 %v250, %v792
        %v794 = vpop.f32.mrf.mxu0
        %v795 = vadd.f32 %v254, %v794
        %v796 = vpop.f32.mrf.mxu0
        %v797 = vadd.f32 %v250, %v796
        %v798 = vpop.f32.mrf.mxu0
        %v799 = vadd.f32 %v254, %v798
        %800 = vmatprep.mubr.bf16.mxu0 0
        %801 = vmatmul.mubr.bf16.gmra.mxu0 %v329
        %v802 = vpop.f32.mrf.mxu0
        %v803 = vadd.f32 %v250, %v802
        %v804 = vpop.f32.mrf.mxu0
        %v805 = vadd.f32 %v254, %v804
        %v806 = vpop.f32.mrf.mxu0
        %v807 = vadd.f32 %v250, %v806
        %v808 = vpop.f32.mrf.mxu0
        %v809 = vadd.f32 %v254, %v808
        %810 = vmatprep.mubr.bf16.mxu0 0
        %811 = vmatmul.mubr.bf16.gmra.mxu0 %v330
        %v812 = vpop.f32.mrf.mxu0
        %v813 = vadd.f32 %v250, %v812
        %v814 = vpop.f32.mrf.mxu0
        %v815 = vadd.f32 %v254, %v814
        %v816 = vpop.f32.mrf.mxu0
        %v817 = vadd.f32 %v250, %v816
        %v818 = vpop.f32.mrf.mxu0
        %v819 = vadd.f32 %v254, %v818
        %820 = vmatprep.mubr.bf16.mxu0 0
        %821 = vmatmul.mubr.bf16.gmra.mxu0 %v331
        %v822 = vpop.f32.mrf.mxu0
        %v823 = vadd.f32 %v250, %v822
        %v824 = vpop.f32.mrf.mxu0
        %v825 = vadd.f32 %v254, %v824
        %v826 = vpop.f32.mrf.mxu0
        %v827 = vadd.f32 %v250, %v826
        %v828 = vpop.f32.mrf.mxu0
        %v829 = vadd.f32 %v254, %v828
        %830 = vmatprep.mubr.bf16.mxu0 0
        %831 = vmatmul.mubr.bf16.gmra.mxu0 %v332
        %v832 = vpop.f32.mrf.mxu0
        %v833 = vadd.f32 %v250, %v832
        %v834 = vpop.f32.mrf.mxu0
        %v835 = vadd.f32 %v254, %v834
        %v836 = vpop.f32.mrf.mxu0
        %v837 = vadd.f32 %v250, %v836
        %v838 = vpop.f32.mrf.mxu0
        %v839 = vadd.f32 %v254, %v838
        %840 = vmatprep.mubr.bf16.mxu0 0
        %841 = vmatmul.mubr.bf16.gmra.mxu0 %v333
        %v842 = vpop.f32.mrf.mxu0
        %v843 = vadd.f32 %v250, %v842
        %v844 = vpop.f32.mrf.mxu0
        %v845 = vadd.f32 %v254, %v844
        %v846 = vpop.f32.mrf.mxu0
        %v847 = vadd.f32 %v250, %v846
        %v848 = vpop.f32.mrf.mxu0
        %v849 = vadd.f32 %v254, %v848
        %850 = vmatprep.mubr.bf16.mxu0 0
        %851 = vmatmul.mubr.bf16.gmra.mxu0 %v334
        %v852 = vpop.f32.mrf.mxu0
        %v853 = vadd.f32 %v250, %v852
        %v854 = vpop.f32.mrf.mxu0
        %v855 = vadd.f32 %v254, %v854
        %v856 = vpop.f32.mrf.mxu0
        %v857 = vadd.f32 %v250, %v856
        %v858 = vpop.f32.mrf.mxu0
        %v859 = vadd.f32 %v254, %v858
        %860 = vmatprep.mubr.bf16.mxu0 0
        %861 = vmatmul.mubr.bf16.gmra.mxu0 %v335
        %v862 = vpop.f32.mrf.mxu0
        %v863 = vadd.f32 %v250, %v862
        %v864 = vpop.f32.mrf.mxu0
        %v865 = vadd.f32 %v254, %v864
        %v866 = vpop.f32.mrf.mxu0
        %v867 = vadd.f32 %v250, %v866
        %v868 = vpop.f32.mrf.mxu0
        %v869 = vadd.f32 %v254, %v868
        %870 = vmatprep.mubr.bf16.mxu0 0
        %871 = vmatmul.mubr.bf16.gmra.mxu0 %v336
        %v872 = vpop.f32.mrf.mxu0
        %v873 = vadd.f32 %v250, %v872
        %v874 = vpop.f32.mrf.mxu0
        %v875 = vadd.f32 %v254, %v874
        %v876 = vpop.f32.mrf.mxu0
        %v877 = vadd.f32 %v250, %v876
        %v878 = vpop.f32.mrf.mxu0
        %v879 = vadd.f32 %v254, %v878
        %880 = vmatprep.mubr.bf16.mxu0 0
        %881 = vmatmul.mubr.bf16.gmra.mxu0 %v337
        %v882 = vpop.f32.mrf.mxu0
        %v883 = vadd.f32 %v250, %v882
        %v884 = vpop.f32.mrf.mxu0
        %v885 = vadd.f32 %v254, %v884
        %v886 = vpop.f32.mrf.mxu0
        %v887 = vadd.f32 %v250, %v886
        %v888 = vpop.f32.mrf.mxu0
        %v889 = vadd.f32 %v254, %v888
        %890 = vmatprep.mubr.bf16.mxu0 0
        %891 = vmatmul.mubr.bf16.gmra.mxu0 %v338
        %v892 = vpop.f32.mrf.mxu0
        %v893 = vadd.f32 %v250, %v892
        %v894 = vpop.f32.mrf.mxu0
        %v895 = vadd.f32 %v254, %v894
        %v896 = vpop.f32.mrf.mxu0
        %v897 = vadd.f32 %v250, %v896
        %v898 = vpop.f32.mrf.mxu0
        %v899 = vadd.f32 %v254, %v898
        %900 = vdwg.mxu0
        %v901 = vmax.f32 %v550, %v552
        %v902 = vmax.f32 %v901, %v743
        %v903 = vmax.f32 %v902, %v745
        %904 = vmax.xlane.f32.xlu0 %v903
        %v905 = vpop.xlane.xlu0 %904
        %v906 = vmax.f32 %v554, %v556
        %v907 = vmax.f32 %v906, %v747
        %v908 = vmax.f32 %v907, %v749
        %909 = vmax.xlane.f32.xlu0 %v908
        %v910 = vpop.xlane.xlu0 %909
        %v911 = vmax.f32 %v560, %v562
        %v912 = vmax.f32 %v911, %v753
        %v913 = vmax.f32 %v912, %v755
        %914 = vmax.xlane.f32.xlu0 %v913
        %v915 = vpop.xlane.xlu0 %914
        %v916 = vmax.f32 %v564, %v566
        %v917 = vmax.f32 %v916, %v757
        %v918 = vmax.f32 %v917, %v759
        %919 = vmax.xlane.f32.xlu0 %v918
        %v920 = vpop.xlane.xlu0 %919
        %v921 = vmax.f32 %v570, %v572
        %v922 = vmax.f32 %v921, %v763
        %v923 = vmax.f32 %v922, %v765
        %924 = vmax.xlane.f32.xlu0 %v923
        %v925 = vpop.xlane.xlu0 %924
        %v926 = vmax.f32 %v574, %v576
        %v927 = vmax.f32 %v926, %v767
        %v928 = vmax.f32 %v927, %v769
        %929 = vmax.xlane.f32.xlu0 %v928
        %v930 = vpop.xlane.xlu0 %929
        %v931 = vmax.f32 %v580, %v582
        %v932 = vmax.f32 %v931, %v773
        %v933 = vmax.f32 %v932, %v775
        %934 = vmax.xlane.f32.xlu0 %v933
        %v935 = vpop.xlane.xlu0 %934
        %v936 = vmax.f32 %v584, %v586
        %v937 = vmax.f32 %v936, %v777
        %v938 = vmax.f32 %v937, %v779
        %939 = vmax.xlane.f32.xlu0 %v938
        %v940 = vpop.xlane.xlu0 %939
        %v941 = vmax.f32 %v590, %v592
        %v942 = vmax.f32 %v941, %v783
        %v943 = vmax.f32 %v942, %v785
        %944 = vmax.xlane.f32.xlu0 %v943
        %v945 = vpop.xlane.xlu0 %944
        %v946 = vmax.f32 %v594, %v596
        %v947 = vmax.f32 %v946, %v787
        %v948 = vmax.f32 %v947, %v789
        %949 = vmax.xlane.f32.xlu0 %v948
        %v950 = vpop.xlane.xlu0 %949
        %v951 = vmax.f32 %v600, %v602
        %v952 = vmax.f32 %v951, %v793
        %v953 = vmax.f32 %v952, %v795
        %954 = vmax.xlane.f32.xlu0 %v953
        %v955 = vpop.xlane.xlu0 %954
        %v956 = vmax.f32 %v604, %v606
        %v957 = vmax.f32 %v956, %v797
        %v958 = vmax.f32 %v957, %v799
        %959 = vmax.xlane.f32.xlu0 %v958
        %v960 = vpop.xlane.xlu0 %959
        %v961 = vmax.f32 %v610, %v612
        %v962 = vmax.f32 %v961, %v803
        %v963 = vmax.f32 %v962, %v805
        %964 = vmax.xlane.f32.xlu0 %v963
        %v965 = vpop.xlane.xlu0 %964
        %v966 = vmax.f32 %v614, %v616
        %v967 = vmax.f32 %v966, %v807
        %v968 = vmax.f32 %v967, %v809
        %969 = vmax.xlane.f32.xlu0 %v968
        %v970 = vpop.xlane.xlu0 %969
        %v971 = vmax.f32 %v620, %v622
        %v972 = vmax.f32 %v971, %v813
        %v973 = vmax.f32 %v972, %v815
        %974 = vmax.xlane.f32.xlu0 %v973
        %v975 = vpop.xlane.xlu0 %974
        %v976 = vmax.f32 %v624, %v626
        %v977 = vmax.f32 %v976, %v817
        %v978 = vmax.f32 %v977, %v819
        %979 = vmax.xlane.f32.xlu0 %v978
        %v980 = vpop.xlane.xlu0 %979
        %v981 = vmax.f32 %v630, %v632
        %v982 = vmax.f32 %v981, %v823
        %v983 = vmax.f32 %v982, %v825
        %984 = vmax.xlane.f32.xlu0 %v983
        %v985 = vpop.xlane.xlu0 %984
        %v986 = vmax.f32 %v634, %v636
        %v987 = vmax.f32 %v986, %v827
        %v988 = vmax.f32 %v987, %v829
        %989 = vmax.xlane.f32.xlu0 %v988
        %v990 = vpop.xlane.xlu0 %989
        %v991 = vmax.f32 %v640, %v642
        %v992 = vmax.f32 %v991, %v833
        %v993 = vmax.f32 %v992, %v835
        %994 = vmax.xlane.f32.xlu0 %v993
        %v995 = vpop.xlane.xlu0 %994
        %v996 = vmax.f32 %v644, %v646
        %v997 = vmax.f32 %v996, %v837
        %v998 = vmax.f32 %v997, %v839
        %999 = vmax.xlane.f32.xlu0 %v998
        %v1000 = vpop.xlane.xlu0 %999
        %v1001 = vmax.f32 %v650, %v652
        %v1002 = vmax.f32 %v1001, %v843
        %v1003 = vmax.f32 %v1002, %v845
        %1004 = vmax.xlane.f32.xlu0 %v1003
        %v1005 = vpop.xlane.xlu0 %1004
        %v1006 = vmax.f32 %v654, %v656
        %v1007 = vmax.f32 %v1006, %v847
        %v1008 = vmax.f32 %v1007, %v849
        %1009 = vmax.xlane.f32.xlu0 %v1008
        %v1010 = vpop.xlane.xlu0 %1009
        %v1011 = vmax.f32 %v660, %v662
        %v1012 = vmax.f32 %v1011, %v853
        %v1013 = vmax.f32 %v1012, %v855
        %1014 = vmax.xlane.f32.xlu0 %v1013
        %v1015 = vpop.xlane.xlu0 %1014
        %v1016 = vmax.f32 %v664, %v666
        %v1017 = vmax.f32 %v1016, %v857
        %v1018 = vmax.f32 %v1017, %v859
        %1019 = vmax.xlane.f32.xlu0 %v1018
        %v1020 = vpop.xlane.xlu0 %1019
        %v1021 = vmax.f32 %v670, %v672
        %v1022 = vmax.f32 %v1021, %v863
        %v1023 = vmax.f32 %v1022, %v865
        %1024 = vmax.xlane.f32.xlu0 %v1023
        %v1025 = vpop.xlane.xlu0 %1024
        %v1026 = vmax.f32 %v674, %v676
        %v1027 = vmax.f32 %v1026, %v867
        %v1028 = vmax.f32 %v1027, %v869
        %1029 = vmax.xlane.f32.xlu0 %v1028
        %v1030 = vpop.xlane.xlu0 %1029
        %v1031 = vmax.f32 %v680, %v682
        %v1032 = vmax.f32 %v1031, %v873
        %v1033 = vmax.f32 %v1032, %v875
        %1034 = vmax.xlane.f32.xlu0 %v1033
        %v1035 = vpop.xlane.xlu0 %1034
        %v1036 = vmax.f32 %v684, %v686
        %v1037 = vmax.f32 %v1036, %v877
        %v1038 = vmax.f32 %v1037, %v879
        %1039 = vmax.xlane.f32.xlu0 %v1038
        %v1040 = vpop.xlane.xlu0 %1039
        %v1041 = vmax.f32 %v690, %v692
        %v1042 = vmax.f32 %v1041, %v883
        %v1043 = vmax.f32 %v1042, %v885
        %1044 = vmax.xlane.f32.xlu0 %v1043
        %v1045 = vpop.xlane.xlu0 %1044
        %v1046 = vmax.f32 %v694, %v696
        %v1047 = vmax.f32 %v1046, %v887
        %v1048 = vmax.f32 %v1047, %v889
        %1049 = vmax.xlane.f32.xlu0 %v1048
        %v1050 = vpop.xlane.xlu0 %1049
        %v1051 = vmax.f32 %v700, %v702
        %v1052 = vmax.f32 %v1051, %v893
        %v1053 = vmax.f32 %v1052, %v895
        %1054 = vmax.xlane.f32.xlu0 %v1053
        %v1055 = vpop.xlane.xlu0 %1054
        %v1056 = vmax.f32 %v704, %v706
        %v1057 = vmax.f32 %v1056, %v897
        %v1058 = vmax.f32 %v1057, %v899
        %1059 = vmax.xlane.f32.xlu0 %v1058
        %v1060 = vpop.xlane.xlu0 %1059
        %v1061 = vsub.f32 %v550, %v905
        %v1062 = vsub.f32 %v552, %v905
        %v1063 = vsub.f32 %v743, %v905
        %v1064 = vsub.f32 %v745, %v905
        %v1065 = vsub.f32 %v554, %v910
        %v1066 = vsub.f32 %v556, %v910
        %v1067 = vsub.f32 %v747, %v910
        %v1068 = vsub.f32 %v749, %v910
        %v1069 = vsub.f32 %v560, %v915
        %v1070 = vsub.f32 %v562, %v915
        %v1071 = vsub.f32 %v753, %v915
        %v1072 = vsub.f32 %v755, %v915
        %v1073 = vsub.f32 %v564, %v920
        %v1074 = vsub.f32 %v566, %v920
        %v1075 = vsub.f32 %v757, %v920
        %v1076 = vsub.f32 %v759, %v920
        %v1077 = vsub.f32 %v570, %v925
        %v1078 = vsub.f32 %v572, %v925
        %v1079 = vsub.f32 %v763, %v925
        %v1080 = vsub.f32 %v765, %v925
        %v1081 = vsub.f32 %v574, %v930
        %v1082 = vsub.f32 %v576, %v930
        %v1083 = vsub.f32 %v767, %v930
        %v1084 = vsub.f32 %v769, %v930
        %v1085 = vsub.f32 %v580, %v935
        %v1086 = vsub.f32 %v582, %v935
        %v1087 = vsub.f32 %v773, %v935
        %v1088 = vsub.f32 %v775, %v935
        %v1089 = vsub.f32 %v584, %v940
        %v1090 = vsub.f32 %v586, %v940
        %v1091 = vsub.f32 %v777, %v940
        %v1092 = vsub.f32 %v779, %v940
        %v1093 = vsub.f32 %v590, %v945
        %v1094 = vsub.f32 %v592, %v945
        %v1095 = vsub.f32 %v783, %v945
        %v1096 = vsub.f32 %v785, %v945
        %v1097 = vsub.f32 %v594, %v950
        %v1098 = vsub.f32 %v596, %v950
        %v1099 = vsub.f32 %v787, %v950
        %v1100 = vsub.f32 %v789, %v950
        %v1101 = vsub.f32 %v600, %v955
        %v1102 = vsub.f32 %v602, %v955
        %v1103 = vsub.f32 %v793, %v955
        %v1104 = vsub.f32 %v795, %v955
        %v1105 = vsub.f32 %v604, %v960
        %v1106 = vsub.f32 %v606, %v960
        %v1107 = vsub.f32 %v797, %v960
        %v1108 = vsub.f32 %v799, %v960
        %v1109 = vsub.f32 %v610, %v965
        %v1110 = vsub.f32 %v612, %v965
        %v1111 = vsub.f32 %v803, %v965
        %v1112 = vsub.f32 %v805, %v965
        %v1113 = vsub.f32 %v614, %v970
        %v1114 = vsub.f32 %v616, %v970
        %v1115 = vsub.f32 %v807, %v970
        %v1116 = vsub.f32 %v809, %v970
        %v1117 = vsub.f32 %v620, %v975
        %v1118 = vsub.f32 %v622, %v975
        %v1119 = vsub.f32 %v813, %v975
        %v1120 = vsub.f32 %v815, %v975
        %v1121 = vsub.f32 %v624, %v980
        %v1122 = vsub.f32 %v626, %v980
        %v1123 = vsub.f32 %v817, %v980
        %v1124 = vsub.f32 %v819, %v980
        %v1125 = vsub.f32 %v630, %v985
        %v1126 = vsub.f32 %v632, %v985
        %v1127 = vsub.f32 %v823, %v985
        %v1128 = vsub.f32 %v825, %v985
        %v1129 = vsub.f32 %v634, %v990
        %v1130 = vsub.f32 %v636, %v990
        %v1131 = vsub.f32 %v827, %v990
        %v1132 = vsub.f32 %v829, %v990
        %v1133 = vsub.f32 %v640, %v995
        %v1134 = vsub.f32 %v642, %v995
        %v1135 = vsub.f32 %v833, %v995
        %v1136 = vsub.f32 %v835, %v995
        %v1137 = vsub.f32 %v644, %v1000
        %v1138 = vsub.f32 %v646, %v1000
        %v1139 = vsub.f32 %v837, %v1000
        %v1140 = vsub.f32 %v839, %v1000
        %v1141 = vsub.f32 %v650, %v1005
        %v1142 = vsub.f32 %v652, %v1005
        %v1143 = vsub.f32 %v843, %v1005
        %v1144 = vsub.f32 %v845, %v1005
        %v1145 = vsub.f32 %v654, %v1010
        %v1146 = vsub.f32 %v656, %v1010
        %v1147 = vsub.f32 %v847, %v1010
        %v1148 = vsub.f32 %v849, %v1010
        %v1149 = vsub.f32 %v660, %v1015
        %v1150 = vsub.f32 %v662, %v1015
        %v1151 = vsub.f32 %v853, %v1015
        %v1152 = vsub.f32 %v855, %v1015
        %v1153 = vsub.f32 %v664, %v1020
        %v1154 = vsub.f32 %v666, %v1020
        %v1155 = vsub.f32 %v857, %v1020
        %v1156 = vsub.f32 %v859, %v1020
        %v1157 = vsub.f32 %v670, %v1025
        %v1158 = vsub.f32 %v672, %v1025
        %v1159 = vsub.f32 %v863, %v1025
        %v1160 = vsub.f32 %v865, %v1025
        %v1161 = vsub.f32 %v674, %v1030
        %v1162 = vsub.f32 %v676, %v1030
        %v1163 = vsub.f32 %v867, %v1030
        %v1164 = vsub.f32 %v869, %v1030
        %v1165 = vsub.f32 %v680, %v1035
        %v1166 = vsub.f32 %v682, %v1035
        %v1167 = vsub.f32 %v873, %v1035
        %v1168 = vsub.f32 %v875, %v1035
        %v1169 = vsub.f32 %v684, %v1040
        %v1170 = vsub.f32 %v686, %v1040
        %v1171 = vsub.f32 %v877, %v1040
        %v1172 = vsub.f32 %v879, %v1040
        %v1173 = vsub.f32 %v690, %v1045
        %v1174 = vsub.f32 %v692, %v1045
        %v1175 = vsub.f32 %v883, %v1045
        %v1176 = vsub.f32 %v885, %v1045
        %v1177 = vsub.f32 %v694, %v1050
        %v1178 = vsub.f32 %v696, %v1050
        %v1179 = vsub.f32 %v887, %v1050
        %v1180 = vsub.f32 %v889, %v1050
        %v1181 = vsub.f32 %v700, %v1055
        %v1182 = vsub.f32 %v702, %v1055
        %v1183 = vsub.f32 %v893, %v1055
        %v1184 = vsub.f32 %v895, %v1055
        %v1185 = vsub.f32 %v704, %v1060
        %v1186 = vsub.f32 %v706, %v1060
        %v1187 = vsub.f32 %v897, %v1060
        %v1188 = vsub.f32 %v899, %v1060
        %v1189 = vmul.f32 %v1061, 1.442695
        %v1190 = vpow.pop %v1189
        %v1191 = vmul.f32 %v1062, 1.442695
        %v1192 = vpow.pop %v1191
        %v1193 = vmul.f32 %v1063, 1.442695
        %v1194 = vpow.pop %v1193
        %v1195 = vmul.f32 %v1064, 1.442695
        %v1196 = vpow.pop %v1195
        %v1197 = vmul.f32 %v1065, 1.442695
        %v1198 = vpow.pop %v1197
        %v1199 = vmul.f32 %v1066, 1.442695
        %v1200 = vpow.pop %v1199
        %v1201 = vmul.f32 %v1067, 1.442695
        %v1202 = vpow.pop %v1201
        %v1203 = vmul.f32 %v1068, 1.442695
        %v1204 = vpow.pop %v1203
        %v1205 = vmul.f32 %v1069, 1.442695
        %v1206 = vpow.pop %v1205
        %v1207 = vmul.f32 %v1070, 1.442695
        %v1208 = vpow.pop %v1207
        %v1209 = vmul.f32 %v1071, 1.442695
        %v1210 = vpow.pop %v1209
        %v1211 = vmul.f32 %v1072, 1.442695
        %v1212 = vpow.pop %v1211
        %v1213 = vmul.f32 %v1073, 1.442695
        %v1214 = vpow.pop %v1213
        %v1215 = vmul.f32 %v1074, 1.442695
        %v1216 = vpow.pop %v1215
        %v1217 = vmul.f32 %v1075, 1.442695
        %v1218 = vpow.pop %v1217
        %v1219 = vmul.f32 %v1076, 1.442695
        %v1220 = vpow.pop %v1219
        %v1221 = vmul.f32 %v1077, 1.442695
        %v1222 = vpow.pop %v1221
        %v1223 = vmul.f32 %v1078, 1.442695
        %v1224 = vpow.pop %v1223
        %v1225 = vmul.f32 %v1079, 1.442695
        %v1226 = vpow.pop %v1225
        %v1227 = vmul.f32 %v1080, 1.442695
        %v1228 = vpow.pop %v1227
        %v1229 = vmul.f32 %v1081, 1.442695
        %v1230 = vpow.pop %v1229
        %v1231 = vmul.f32 %v1082, 1.442695
        %v1232 = vpow.pop %v1231
        %v1233 = vmul.f32 %v1083, 1.442695
        %v1234 = vpow.pop %v1233
        %v1235 = vmul.f32 %v1084, 1.442695
        %v1236 = vpow.pop %v1235
        %v1237 = vmul.f32 %v1085, 1.442695
        %v1238 = vpow.pop %v1237
        %v1239 = vmul.f32 %v1086, 1.442695
        %v1240 = vpow.pop %v1239
        %v1241 = vmul.f32 %v1087, 1.442695
        %v1242 = vpow.pop %v1241
        %v1243 = vmul.f32 %v1088, 1.442695
        %v1244 = vpow.pop %v1243
        %v1245 = vmul.f32 %v1089, 1.442695
        %v1246 = vpow.pop %v1245
        %v1247 = vmul.f32 %v1090, 1.442695
        %v1248 = vpow.pop %v1247
        %v1249 = vmul.f32 %v1091, 1.442695
        %v1250 = vpow.pop %v1249
        %v1251 = vmul.f32 %v1092, 1.442695
        %v1252 = vpow.pop %v1251
        %v1253 = vmul.f32 %v1093, 1.442695
        %v1254 = vpow.pop %v1253
        %v1255 = vmul.f32 %v1094, 1.442695
        %v1256 = vpow.pop %v1255
        %v1257 = vmul.f32 %v1095, 1.442695
        %v1258 = vpow.pop %v1257
        %v1259 = vmul.f32 %v1096, 1.442695
        %v1260 = vpow.pop %v1259
        %v1261 = vmul.f32 %v1097, 1.442695
        %v1262 = vpow.pop %v1261
        %v1263 = vmul.f32 %v1098, 1.442695
        %v1264 = vpow.pop %v1263
        %v1265 = vmul.f32 %v1099, 1.442695
        %v1266 = vpow.pop %v1265
        %v1267 = vmul.f32 %v1100, 1.442695
        %v1268 = vpow.pop %v1267
        %v1269 = vmul.f32 %v1101, 1.442695
        %v1270 = vpow.pop %v1269
        %v1271 = vmul.f32 %v1102, 1.442695
        %v1272 = vpow.pop %v1271
        %v1273 = vmul.f32 %v1103, 1.442695
        %v1274 = vpow.pop %v1273
        %v1275 = vmul.f32 %v1104, 1.442695
        %v1276 = vpow.pop %v1275
        %v1277 = vmul.f32 %v1105, 1.442695
        %v1278 = vpow.pop %v1277
        %v1279 = vmul.f32 %v1106, 1.442695
        %v1280 = vpow.pop %v1279
        %v1281 = vmul.f32 %v1107, 1.442695
        %v1282 = vpow.pop %v1281
        %v1283 = vmul.f32 %v1108, 1.442695
        %v1284 = vpow.pop %v1283
        %v1285 = vmul.f32 %v1109, 1.442695
        %v1286 = vpow.pop %v1285
        %v1287 = vmul.f32 %v1110, 1.442695
        %v1288 = vpow.pop %v1287
        %v1289 = vmul.f32 %v1111, 1.442695
        %v1290 = vpow.pop %v1289
        %v1291 = vmul.f32 %v1112, 1.442695
        %v1292 = vpow.pop %v1291
        %v1293 = vmul.f32 %v1113, 1.442695
        %v1294 = vpow.pop %v1293
        %v1295 = vmul.f32 %v1114, 1.442695
        %v1296 = vpow.pop %v1295
        %v1297 = vmul.f32 %v1115, 1.442695
        %v1298 = vpow.pop %v1297
        %v1299 = vmul.f32 %v1116, 1.442695
        %v1300 = vpow.pop %v1299
        %v1301 = vmul.f32 %v1117, 1.442695
        %v1302 = vpow.pop %v1301
        %v1303 = vmul.f32 %v1118, 1.442695
        %v1304 = vpow.pop %v1303
        %v1305 = vmul.f32 %v1119, 1.442695
        %v1306 = vpow.pop %v1305
        %v1307 = vmul.f32 %v1120, 1.442695
        %v1308 = vpow.pop %v1307
        %v1309 = vmul.f32 %v1121, 1.442695
        %v1310 = vpow.pop %v1309
        %v1311 = vmul.f32 %v1122, 1.442695
        %v1312 = vpow.pop %v1311
        %v1313 = vmul.f32 %v1123, 1.442695
        %v1314 = vpow.pop %v1313
        %v1315 = vmul.f32 %v1124, 1.442695
        %v1316 = vpow.pop %v1315
        %v1317 = vmul.f32 %v1125, 1.442695
        %v1318 = vpow.pop %v1317
        %v1319 = vmul.f32 %v1126, 1.442695
        %v1320 = vpow.pop %v1319
        %v1321 = vmul.f32 %v1127, 1.442695
        %v1322 = vpow.pop %v1321
        %v1323 = vmul.f32 %v1128, 1.442695
        %v1324 = vpow.pop %v1323
        %v1325 = vmul.f32 %v1129, 1.442695
        %v1326 = vpow.pop %v1325
        %v1327 = vmul.f32 %v1130, 1.442695
        %v1328 = vpow.pop %v1327
        %v1329 = vmul.f32 %v1131, 1.442695
        %v1330 = vpow.pop %v1329
        %v1331 = vmul.f32 %v1132, 1.442695
        %v1332 = vpow.pop %v1331
        %v1333 = vmul.f32 %v1133, 1.442695
        %v1334 = vpow.pop %v1333
        %v1335 = vmul.f32 %v1134, 1.442695
        %v1336 = vpow.pop %v1335
        %v1337 = vmul.f32 %v1135, 1.442695
        %v1338 = vpow.pop %v1337
        %v1339 = vmul.f32 %v1136, 1.442695
        %v1340 = vpow.pop %v1339
        %v1341 = vmul.f32 %v1137, 1.442695
        %v1342 = vpow.pop %v1341
        %v1343 = vmul.f32 %v1138, 1.442695
        %v1344 = vpow.pop %v1343
        %v1345 = vmul.f32 %v1139, 1.442695
        %v1346 = vpow.pop %v1345
        %v1347 = vmul.f32 %v1140, 1.442695
        %v1348 = vpow.pop %v1347
        %v1349 = vmul.f32 %v1141, 1.442695
        %v1350 = vpow.pop %v1349
        %v1351 = vmul.f32 %v1142, 1.442695
        %v1352 = vpow.pop %v1351
        %v1353 = vmul.f32 %v1143, 1.442695
        %v1354 = vpow.pop %v1353
        %v1355 = vmul.f32 %v1144, 1.442695
        %v1356 = vpow.pop %v1355
        %v1357 = vmul.f32 %v1145, 1.442695
        %v1358 = vpow.pop %v1357
        %v1359 = vmul.f32 %v1146, 1.442695
        %v1360 = vpow.pop %v1359
        %v1361 = vmul.f32 %v1147, 1.442695
        %v1362 = vpow.pop %v1361
        %v1363 = vmul.f32 %v1148, 1.442695
        %v1364 = vpow.pop %v1363
        %v1365 = vmul.f32 %v1149, 1.442695
        %v1366 = vpow.pop %v1365
        %v1367 = vmul.f32 %v1150, 1.442695
        %v1368 = vpow.pop %v1367
        %v1369 = vmul.f32 %v1151, 1.442695
        %v1370 = vpow.pop %v1369
        %v1371 = vmul.f32 %v1152, 1.442695
        %v1372 = vpow.pop %v1371
        %v1373 = vmul.f32 %v1153, 1.442695
        %v1374 = vpow.pop %v1373
        %v1375 = vmul.f32 %v1154, 1.442695
        %v1376 = vpow.pop %v1375
        %v1377 = vmul.f32 %v1155, 1.442695
        %v1378 = vpow.pop %v1377
        %v1379 = vmul.f32 %v1156, 1.442695
        %v1380 = vpow.pop %v1379
        %v1381 = vmul.f32 %v1157, 1.442695
        %v1382 = vpow.pop %v1381
        %v1383 = vmul.f32 %v1158, 1.442695
        %v1384 = vpow.pop %v1383
        %v1385 = vmul.f32 %v1159, 1.442695
        %v1386 = vpow.pop %v1385
        %v1387 = vmul.f32 %v1160, 1.442695
        %v1388 = vpow.pop %v1387
        %v1389 = vmul.f32 %v1161, 1.442695
        %v1390 = vpow.pop %v1389
        %v1391 = vmul.f32 %v1162, 1.442695
        %v1392 = vpow.pop %v1391
        %v1393 = vmul.f32 %v1163, 1.442695
        %v1394 = vpow.pop %v1393
        %v1395 = vmul.f32 %v1164, 1.442695
        %v1396 = vpow.pop %v1395
        %v1397 = vmul.f32 %v1165, 1.442695
        %v1398 = vpow.pop %v1397
        %v1399 = vmul.f32 %v1166, 1.442695
        %v1400 = vpow.pop %v1399
        %v1401 = vmul.f32 %v1167, 1.442695
        %v1402 = vpow.pop %v1401
        %v1403 = vmul.f32 %v1168, 1.442695
        %v1404 = vpow.pop %v1403
        %v1405 = vmul.f32 %v1169, 1.442695
        %v1406 = vpow.pop %v1405
        %v1407 = vmul.f32 %v1170, 1.442695
        %v1408 = vpow.pop %v1407
        %v1409 = vmul.f32 %v1171, 1.442695
        %v1410 = vpow.pop %v1409
        %v1411 = vmul.f32 %v1172, 1.442695
        %v1412 = vpow.pop %v1411
        %v1413 = vmul.f32 %v1173, 1.442695
        %v1414 = vpow.pop %v1413
        %v1415 = vmul.f32 %v1174, 1.442695
        %v1416 = vpow.pop %v1415
        %v1417 = vmul.f32 %v1175, 1.442695
        %v1418 = vpow.pop %v1417
        %v1419 = vmul.f32 %v1176, 1.442695
        %v1420 = vpow.pop %v1419
        %v1421 = vmul.f32 %v1177, 1.442695
        %v1422 = vpow.pop %v1421
        %v1423 = vmul.f32 %v1178, 1.442695
        %v1424 = vpow.pop %v1423
        %v1425 = vmul.f32 %v1179, 1.442695
        %v1426 = vpow.pop %v1425
        %v1427 = vmul.f32 %v1180, 1.442695
        %v1428 = vpow.pop %v1427
        %v1429 = vmul.f32 %v1181, 1.442695
        %v1430 = vpow.pop %v1429
        %v1431 = vmul.f32 %v1182, 1.442695
        %v1432 = vpow.pop %v1431
        %v1433 = vmul.f32 %v1183, 1.442695
        %v1434 = vpow.pop %v1433
        %v1435 = vmul.f32 %v1184, 1.442695
        %v1436 = vpow.pop %v1435
        %v1437 = vmul.f32 %v1185, 1.442695
        %v1438 = vpow.pop %v1437
        %v1439 = vmul.f32 %v1186, 1.442695
        %v1440 = vpow.pop %v1439
        %v1441 = vmul.f32 %v1187, 1.442695
        %v1442 = vpow.pop %v1441
        %v1443 = vmul.f32 %v1188, 1.442695
        %v1444 = vpow.pop %v1443
        %v1445 = vadd.f32 %v1190, %v1192
        %v1446 = vadd.f32 %v1445, %v1194
        %v1447 = vadd.f32 %v1446, %v1196
        %1448 = vadd.xlane.f32.xlu0 %v1447
        %v1449 = vpop.xlane.xlu0 %1448
        %v1450 = vadd.f32 %v1198, %v1200
        %v1451 = vadd.f32 %v1450, %v1202
        %v1452 = vadd.f32 %v1451, %v1204
        %1453 = vadd.xlane.f32.xlu0 %v1452
        %v1454 = vpop.xlane.xlu0 %1453
        %v1455 = vadd.f32 %v1206, %v1208
        %v1456 = vadd.f32 %v1455, %v1210
        %v1457 = vadd.f32 %v1456, %v1212
        %1458 = vadd.xlane.f32.xlu0 %v1457
        %v1459 = vpop.xlane.xlu0 %1458
        %v1460 = vadd.f32 %v1214, %v1216
        %v1461 = vadd.f32 %v1460, %v1218
        %v1462 = vadd.f32 %v1461, %v1220
        %1463 = vadd.xlane.f32.xlu0 %v1462
        %v1464 = vpop.xlane.xlu0 %1463
        %v1465 = vadd.f32 %v1222, %v1224
        %v1466 = vadd.f32 %v1465, %v1226
        %v1467 = vadd.f32 %v1466, %v1228
        %1468 = vadd.xlane.f32.xlu0 %v1467
        %v1469 = vpop.xlane.xlu0 %1468
        %v1470 = vadd.f32 %v1230, %v1232
        %v1471 = vadd.f32 %v1470, %v1234
        %v1472 = vadd.f32 %v1471, %v1236
        %1473 = vadd.xlane.f32.xlu0 %v1472
        %v1474 = vpop.xlane.xlu0 %1473
        %v1475 = vadd.f32 %v1238, %v1240
        %v1476 = vadd.f32 %v1475, %v1242
        %v1477 = vadd.f32 %v1476, %v1244
        %1478 = vadd.xlane.f32.xlu0 %v1477
        %v1479 = vpop.xlane.xlu0 %1478
        %v1480 = vadd.f32 %v1246, %v1248
        %v1481 = vadd.f32 %v1480, %v1250
        %v1482 = vadd.f32 %v1481, %v1252
        %1483 = vadd.xlane.f32.xlu0 %v1482
        %v1484 = vpop.xlane.xlu0 %1483
        %v1485 = vadd.f32 %v1254, %v1256
        %v1486 = vadd.f32 %v1485, %v1258
        %v1487 = vadd.f32 %v1486, %v1260
        %1488 = vadd.xlane.f32.xlu0 %v1487
        %v1489 = vpop.xlane.xlu0 %1488
        %v1490 = vadd.f32 %v1262, %v1264
        %v1491 = vadd.f32 %v1490, %v1266
        %v1492 = vadd.f32 %v1491, %v1268
        %1493 = vadd.xlane.f32.xlu0 %v1492
        %v1494 = vpop.xlane.xlu0 %1493
        %v1495 = vadd.f32 %v1270, %v1272
        %v1496 = vadd.f32 %v1495, %v1274
        %v1497 = vadd.f32 %v1496, %v1276
        %1498 = vadd.xlane.f32.xlu0 %v1497
        %v1499 = vpop.xlane.xlu0 %1498
        %v1500 = vadd.f32 %v1278, %v1280
        %v1501 = vadd.f32 %v1500, %v1282
        %v1502 = vadd.f32 %v1501, %v1284
        %1503 = vadd.xlane.f32.xlu0 %v1502
        %v1504 = vpop.xlane.xlu0 %1503
        %v1505 = vadd.f32 %v1286, %v1288
        %v1506 = vadd.f32 %v1505, %v1290
        %v1507 = vadd.f32 %v1506, %v1292
        %1508 = vadd.xlane.f32.xlu0 %v1507
        %v1509 = vpop.xlane.xlu0 %1508
        %v1510 = vadd.f32 %v1294, %v1296
        %v1511 = vadd.f32 %v1510, %v1298
        %v1512 = vadd.f32 %v1511, %v1300
        %1513 = vadd.xlane.f32.xlu0 %v1512
        %v1514 = vpop.xlane.xlu0 %1513
        %v1515 = vadd.f32 %v1302, %v1304
        %v1516 = vadd.f32 %v1515, %v1306
        %v1517 = vadd.f32 %v1516, %v1308
        %1518 = vadd.xlane.f32.xlu0 %v1517
        %v1519 = vpop.xlane.xlu0 %1518
        %v1520 = vadd.f32 %v1310, %v1312
        %v1521 = vadd.f32 %v1520, %v1314
        %v1522 = vadd.f32 %v1521, %v1316
        %1523 = vadd.xlane.f32.xlu0 %v1522
        %v1524 = vpop.xlane.xlu0 %1523
        %v1525 = vadd.f32 %v1318, %v1320
        %v1526 = vadd.f32 %v1525, %v1322
        %v1527 = vadd.f32 %v1526, %v1324
        %1528 = vadd.xlane.f32.xlu0 %v1527
        %v1529 = vpop.xlane.xlu0 %1528
        %v1530 = vadd.f32 %v1326, %v1328
        %v1531 = vadd.f32 %v1530, %v1330
        %v1532 = vadd.f32 %v1531, %v1332
        %1533 = vadd.xlane.f32.xlu0 %v1532
        %v1534 = vpop.xlane.xlu0 %1533
        %v1535 = vadd.f32 %v1334, %v1336
        %v1536 = vadd.f32 %v1535, %v1338
        %v1537 = vadd.f32 %v1536, %v1340
        %1538 = vadd.xlane.f32.xlu0 %v1537
        %v1539 = vpop.xlane.xlu0 %1538
        %v1540 = vadd.f32 %v1342, %v1344
        %v1541 = vadd.f32 %v1540, %v1346
        %v1542 = vadd.f32 %v1541, %v1348
        %1543 = vadd.xlane.f32.xlu0 %v1542
        %v1544 = vpop.xlane.xlu0 %1543
        %v1545 = vadd.f32 %v1350, %v1352
        %v1546 = vadd.f32 %v1545, %v1354
        %v1547 = vadd.f32 %v1546, %v1356
        %1548 = vadd.xlane.f32.xlu0 %v1547
        %v1549 = vpop.xlane.xlu0 %1548
        %v1550 = vadd.f32 %v1358, %v1360
        %v1551 = vadd.f32 %v1550, %v1362
        %v1552 = vadd.f32 %v1551, %v1364
        %1553 = vadd.xlane.f32.xlu0 %v1552
        %v1554 = vpop.xlane.xlu0 %1553
        %v1555 = vadd.f32 %v1366, %v1368
        %v1556 = vadd.f32 %v1555, %v1370
        %v1557 = vadd.f32 %v1556, %v1372
        %1558 = vadd.xlane.f32.xlu0 %v1557
        %v1559 = vpop.xlane.xlu0 %1558
        %v1560 = vadd.f32 %v1374, %v1376
        %v1561 = vadd.f32 %v1560, %v1378
        %v1562 = vadd.f32 %v1561, %v1380
        %1563 = vadd.xlane.f32.xlu0 %v1562
        %v1564 = vpop.xlane.xlu0 %1563
        %v1565 = vadd.f32 %v1382, %v1384
        %v1566 = vadd.f32 %v1565, %v1386
        %v1567 = vadd.f32 %v1566, %v1388
        %1568 = vadd.xlane.f32.xlu0 %v1567
        %v1569 = vpop.xlane.xlu0 %1568
        %v1570 = vadd.f32 %v1390, %v1392
        %v1571 = vadd.f32 %v1570, %v1394
        %v1572 = vadd.f32 %v1571, %v1396
        %1573 = vadd.xlane.f32.xlu0 %v1572
        %v1574 = vpop.xlane.xlu0 %1573
        %v1575 = vadd.f32 %v1398, %v1400
        %v1576 = vadd.f32 %v1575, %v1402
        %v1577 = vadd.f32 %v1576, %v1404
        %1578 = vadd.xlane.f32.xlu0 %v1577
        %v1579 = vpop.xlane.xlu0 %1578
        %v1580 = vadd.f32 %v1406, %v1408
        %v1581 = vadd.f32 %v1580, %v1410
        %v1582 = vadd.f32 %v1581, %v1412
        %1583 = vadd.xlane.f32.xlu0 %v1582
        %v1584 = vpop.xlane.xlu0 %1583
        %v1585 = vadd.f32 %v1414, %v1416
        %v1586 = vadd.f32 %v1585, %v1418
        %v1587 = vadd.f32 %v1586, %v1420
        %1588 = vadd.xlane.f32.xlu0 %v1587
        %v1589 = vpop.xlane.xlu0 %1588
        %v1590 = vadd.f32 %v1422, %v1424
        %v1591 = vadd.f32 %v1590, %v1426
        %v1592 = vadd.f32 %v1591, %v1428
        %1593 = vadd.xlane.f32.xlu0 %v1592
        %v1594 = vpop.xlane.xlu0 %1593
        %v1595 = vadd.f32 %v1430, %v1432
        %v1596 = vadd.f32 %v1595, %v1434
        %v1597 = vadd.f32 %v1596, %v1436
        %1598 = vadd.xlane.f32.xlu0 %v1597
        %v1599 = vpop.xlane.xlu0 %1598
        %v1600 = vadd.f32 %v1438, %v1440
        %v1601 = vadd.f32 %v1600, %v1442
        %v1602 = vadd.f32 %v1601, %v1444
        %1603 = vadd.xlane.f32.xlu0 %v1602
        %v1604 = vpop.xlane.xlu0 %1603
        %v1605 = vlog2.pop %v1449
        %v1606 = vmul.f32 %v1605, 0.6931472
        %v1607 = vlog2.pop %v1454
        %v1608 = vmul.f32 %v1607, 0.6931472
        %v1609 = vlog2.pop %v1459
        %v1610 = vmul.f32 %v1609, 0.6931472
        %v1611 = vlog2.pop %v1464
        %v1612 = vmul.f32 %v1611, 0.6931472
        %v1613 = vlog2.pop %v1469
        %v1614 = vmul.f32 %v1613, 0.6931472
        %v1615 = vlog2.pop %v1474
        %v1616 = vmul.f32 %v1615, 0.6931472
        %v1617 = vlog2.pop %v1479
        %v1618 = vmul.f32 %v1617, 0.6931472
        %v1619 = vlog2.pop %v1484
        %v1620 = vmul.f32 %v1619, 0.6931472
        %v1621 = vlog2.pop %v1489
        %v1622 = vmul.f32 %v1621, 0.6931472
        %v1623 = vlog2.pop %v1494
        %v1624 = vmul.f32 %v1623, 0.6931472
        %v1625 = vlog2.pop %v1499
        %v1626 = vmul.f32 %v1625, 0.6931472
        %v1627 = vlog2.pop %v1504
        %v1628 = vmul.f32 %v1627, 0.6931472
        %v1629 = vlog2.pop %v1509
        %v1630 = vmul.f32 %v1629, 0.6931472
        %v1631 = vlog2.pop %v1514
        %v1632 = vmul.f32 %v1631, 0.6931472
        %v1633 = vlog2.pop %v1519
        %v1634 = vmul.f32 %v1633, 0.6931472
        %v1635 = vlog2.pop %v1524
        %v1636 = vmul.f32 %v1635, 0.6931472
        %v1637 = vlog2.pop %v1529
        %v1638 = vmul.f32 %v1637, 0.6931472
        %v1639 = vlog2.pop %v1534
        %v1640 = vmul.f32 %v1639, 0.6931472
        %v1641 = vlog2.pop %v1539
        %v1642 = vmul.f32 %v1641, 0.6931472
        %v1643 = vlog2.pop %v1544
        %v1644 = vmul.f32 %v1643, 0.6931472
        %v1645 = vlog2.pop %v1549
        %v1646 = vmul.f32 %v1645, 0.6931472
        %v1647 = vlog2.pop %v1554
        %v1648 = vmul.f32 %v1647, 0.6931472
        %v1649 = vlog2.pop %v1559
        %v1650 = vmul.f32 %v1649, 0.6931472
        %v1651 = vlog2.pop %v1564
        %v1652 = vmul.f32 %v1651, 0.6931472
        %v1653 = vlog2.pop %v1569
        %v1654 = vmul.f32 %v1653, 0.6931472
        %v1655 = vlog2.pop %v1574
        %v1656 = vmul.f32 %v1655, 0.6931472
        %v1657 = vlog2.pop %v1579
        %v1658 = vmul.f32 %v1657, 0.6931472
        %v1659 = vlog2.pop %v1584
        %v1660 = vmul.f32 %v1659, 0.6931472
        %v1661 = vlog2.pop %v1589
        %v1662 = vmul.f32 %v1661, 0.6931472
        %v1663 = vlog2.pop %v1594
        %v1664 = vmul.f32 %v1663, 0.6931472
        %v1665 = vlog2.pop %v1599
        %v1666 = vmul.f32 %v1665, 0.6931472
        %v1667 = vlog2.pop %v1604
        %v1668 = vmul.f32 %v1667, 0.6931472
        %v1669 = vsub.f32 %v1061, %v1606
        %v1670 = vsub.f32 %v1062, %v1606
        %v1671 = vsub.f32 %v1063, %v1606
        %v1672 = vsub.f32 %v1064, %v1606
        %v1673 = vsub.f32 %v1065, %v1608
        %v1674 = vsub.f32 %v1066, %v1608
        %v1675 = vsub.f32 %v1067, %v1608
        %v1676 = vsub.f32 %v1068, %v1608
        %v1677 = vsub.f32 %v1069, %v1610
        %v1678 = vsub.f32 %v1070, %v1610
        %v1679 = vsub.f32 %v1071, %v1610
        %v1680 = vsub.f32 %v1072, %v1610
        %v1681 = vsub.f32 %v1073, %v1612
        %v1682 = vsub.f32 %v1074, %v1612
        %v1683 = vsub.f32 %v1075, %v1612
        %v1684 = vsub.f32 %v1076, %v1612
        %v1685 = vsub.f32 %v1077, %v1614
        %v1686 = vsub.f32 %v1078, %v1614
        %v1687 = vsub.f32 %v1079, %v1614
        %v1688 = vsub.f32 %v1080, %v1614
        %v1689 = vsub.f32 %v1081, %v1616
        %v1690 = vsub.f32 %v1082, %v1616
        %v1691 = vsub.f32 %v1083, %v1616
        %v1692 = vsub.f32 %v1084, %v1616
        %v1693 = vsub.f32 %v1085, %v1618
        %v1694 = vsub.f32 %v1086, %v1618
        %v1695 = vsub.f32 %v1087, %v1618
        %v1696 = vsub.f32 %v1088, %v1618
        %v1697 = vsub.f32 %v1089, %v1620
        %v1698 = vsub.f32 %v1090, %v1620
        %v1699 = vsub.f32 %v1091, %v1620
        %v1700 = vsub.f32 %v1092, %v1620
        %v1701 = vsub.f32 %v1093, %v1622
        %v1702 = vsub.f32 %v1094, %v1622
        %v1703 = vsub.f32 %v1095, %v1622
        %v1704 = vsub.f32 %v1096, %v1622
        %v1705 = vsub.f32 %v1097, %v1624
        %v1706 = vsub.f32 %v1098, %v1624
        %v1707 = vsub.f32 %v1099, %v1624
        %v1708 = vsub.f32 %v1100, %v1624
        %v1709 = vsub.f32 %v1101, %v1626
        %v1710 = vsub.f32 %v1102, %v1626
        %v1711 = vsub.f32 %v1103, %v1626
        %v1712 = vsub.f32 %v1104, %v1626
        %v1713 = vsub.f32 %v1105, %v1628
        %v1714 = vsub.f32 %v1106, %v1628
        %v1715 = vsub.f32 %v1107, %v1628
        %v1716 = vsub.f32 %v1108, %v1628
        %v1717 = vsub.f32 %v1109, %v1630
        %v1718 = vsub.f32 %v1110, %v1630
        %v1719 = vsub.f32 %v1111, %v1630
        %v1720 = vsub.f32 %v1112, %v1630
        %v1721 = vsub.f32 %v1113, %v1632
        %v1722 = vsub.f32 %v1114, %v1632
        %v1723 = vsub.f32 %v1115, %v1632
        %v1724 = vsub.f32 %v1116, %v1632
        %v1725 = vsub.f32 %v1117, %v1634
        %v1726 = vsub.f32 %v1118, %v1634
        %v1727 = vsub.f32 %v1119, %v1634
        %v1728 = vsub.f32 %v1120, %v1634
        %v1729 = vsub.f32 %v1121, %v1636
        %v1730 = vsub.f32 %v1122, %v1636
        %v1731 = vsub.f32 %v1123, %v1636
        %v1732 = vsub.f32 %v1124, %v1636
        %v1733 = vsub.f32 %v1125, %v1638
        %v1734 = vsub.f32 %v1126, %v1638
        %v1735 = vsub.f32 %v1127, %v1638
        %v1736 = vsub.f32 %v1128, %v1638
        %v1737 = vsub.f32 %v1129, %v1640
        %v1738 = vsub.f32 %v1130, %v1640
        %v1739 = vsub.f32 %v1131, %v1640
        %v1740 = vsub.f32 %v1132, %v1640
        %v1741 = vsub.f32 %v1133, %v1642
        %v1742 = vsub.f32 %v1134, %v1642
        %v1743 = vsub.f32 %v1135, %v1642
        %v1744 = vsub.f32 %v1136, %v1642
        %v1745 = vsub.f32 %v1137, %v1644
        %v1746 = vsub.f32 %v1138, %v1644
        %v1747 = vsub.f32 %v1139, %v1644
        %v1748 = vsub.f32 %v1140, %v1644
        %v1749 = vsub.f32 %v1141, %v1646
        %v1750 = vsub.f32 %v1142, %v1646
        %v1751 = vsub.f32 %v1143, %v1646
        %v1752 = vsub.f32 %v1144, %v1646
        %v1753 = vsub.f32 %v1145, %v1648
        %v1754 = vsub.f32 %v1146, %v1648
        %v1755 = vsub.f32 %v1147, %v1648
        %v1756 = vsub.f32 %v1148, %v1648
        %v1757 = vsub.f32 %v1149, %v1650
        %v1758 = vsub.f32 %v1150, %v1650
        %v1759 = vsub.f32 %v1151, %v1650
        %v1760 = vsub.f32 %v1152, %v1650
        %v1761 = vsub.f32 %v1153, %v1652
        %v1762 = vsub.f32 %v1154, %v1652
        %v1763 = vsub.f32 %v1155, %v1652
        %v1764 = vsub.f32 %v1156, %v1652
        %v1765 = vsub.f32 %v1157, %v1654
        %v1766 = vsub.f32 %v1158, %v1654
        %v1767 = vsub.f32 %v1159, %v1654
        %v1768 = vsub.f32 %v1160, %v1654
        %v1769 = vsub.f32 %v1161, %v1656
        %v1770 = vsub.f32 %v1162, %v1656
        %v1771 = vsub.f32 %v1163, %v1656
        %v1772 = vsub.f32 %v1164, %v1656
        %v1773 = vsub.f32 %v1165, %v1658
        %v1774 = vsub.f32 %v1166, %v1658
        %v1775 = vsub.f32 %v1167, %v1658
        %v1776 = vsub.f32 %v1168, %v1658
        %v1777 = vsub.f32 %v1169, %v1660
        %v1778 = vsub.f32 %v1170, %v1660
        %v1779 = vsub.f32 %v1171, %v1660
        %v1780 = vsub.f32 %v1172, %v1660
        %v1781 = vsub.f32 %v1173, %v1662
        %v1782 = vsub.f32 %v1174, %v1662
        %v1783 = vsub.f32 %v1175, %v1662
        %v1784 = vsub.f32 %v1176, %v1662
        %v1785 = vsub.f32 %v1177, %v1664
        %v1786 = vsub.f32 %v1178, %v1664
        %v1787 = vsub.f32 %v1179, %v1664
        %v1788 = vsub.f32 %v1180, %v1664
        %v1789 = vsub.f32 %v1181, %v1666
        %v1790 = vsub.f32 %v1182, %v1666
        %v1791 = vsub.f32 %v1183, %v1666
        %v1792 = vsub.f32 %v1184, %v1666
        %v1793 = vsub.f32 %v1185, %v1668
        %v1794 = vsub.f32 %v1186, %v1668
        %v1795 = vsub.f32 %v1187, %v1668
        %v1796 = vsub.f32 %v1188, %v1668
        %1797 = vst [vmem:[%s164] sm:$0xff] %v1669
        %1798 = vst [vmem:[%s164 + $0x8] sm:$0xff] %v1670
        %1799 = vst [vmem:[%s164 + $0x10] sm:$0xff] %v1671
        %1800 = vst [vmem:[%s164 + $0x18] sm:$0xff] %v1672
        %1801 = vst [vmem:[%s164 + $0x20] sm:$0xff] %v1673
        %1802 = vst [vmem:[%s164 + $0x28] sm:$0xff] %v1674
        %1803 = vst [vmem:[%s164 + $0x30] sm:$0xff] %v1675
        %1804 = vst [vmem:[%s164 + $0x38] sm:$0xff] %v1676
        %1805 = vst [vmem:[%s164 + $0x40] sm:$0xff] %v1677
        %1806 = vst [vmem:[%s164 + $0x48] sm:$0xff] %v1678
        %1807 = vst [vmem:[%s164 + $0x50] sm:$0xff] %v1679
        %1808 = vst [vmem:[%s164 + $0x58] sm:$0xff] %v1680
        %1809 = vst [vmem:[%s164 + $0x60] sm:$0xff] %v1681
        %1810 = vst [vmem:[%s164 + $0x68] sm:$0xff] %v1682
        %1811 = vst [vmem:[%s164 + $0x70] sm:$0xff] %v1683
        %1812 = vst [vmem:[%s164 + $0x78] sm:$0xff] %v1684
        %1813 = vst [vmem:[%s164 + $0x80] sm:$0xff] %v1685
        %1814 = vst [vmem:[%s164 + $0x88] sm:$0xff] %v1686
        %1815 = vst [vmem:[%s164 + $0x90] sm:$0xff] %v1687
        %1816 = vst [vmem:[%s164 + $0x98] sm:$0xff] %v1688
        %1817 = vst [vmem:[%s164 + $0xa0] sm:$0xff] %v1689
        %1818 = vst [vmem:[%s164 + $0xa8] sm:$0xff] %v1690
        %1819 = vst [vmem:[%s164 + $0xb0] sm:$0xff] %v1691
        %1820 = vst [vmem:[%s164 + $0xb8] sm:$0xff] %v1692
        %1821 = vst [vmem:[%s164 + $0xc0] sm:$0xff] %v1693
        %1822 = vst [vmem:[%s164 + $0xc8] sm:$0xff] %v1694
        %1823 = vst [vmem:[%s164 + $0xd0] sm:$0xff] %v1695
        %1824 = vst [vmem:[%s164 + $0xd8] sm:$0xff] %v1696
        %1825 = vst [vmem:[%s164 + $0xe0] sm:$0xff] %v1697
        %1826 = vst [vmem:[%s164 + $0xe8] sm:$0xff] %v1698
        %1827 = vst [vmem:[%s164 + $0xf0] sm:$0xff] %v1699
        %1828 = vst [vmem:[%s164 + $0xf8] sm:$0xff] %v1700
        %1829 = vst [vmem:[%s164 + $0x100] sm:$0xff] %v1701
        %1830 = vst [vmem:[%s164 + $0x108] sm:$0xff] %v1702
        %1831 = vst [vmem:[%s164 + $0x110] sm:$0xff] %v1703
        %1832 = vst [vmem:[%s164 + $0x118] sm:$0xff] %v1704
        %1833 = vst [vmem:[%s164 + $0x120] sm:$0xff] %v1705
        %1834 = vst [vmem:[%s164 + $0x128] sm:$0xff] %v1706
        %1835 = vst [vmem:[%s164 + $0x130] sm:$0xff] %v1707
        %1836 = vst [vmem:[%s164 + $0x138] sm:$0xff] %v1708
        %1837 = vst [vmem:[%s164 + $0x140] sm:$0xff] %v1709
        %1838 = vst [vmem:[%s164 + $0x148] sm:$0xff] %v1710
        %1839 = vst [vmem:[%s164 + $0x150] sm:$0xff] %v1711
        %1840 = vst [vmem:[%s164 + $0x158] sm:$0xff] %v1712
        %1841 = vst [vmem:[%s164 + $0x160] sm:$0xff] %v1713
        %1842 = vst [vmem:[%s164 + $0x168] sm:$0xff] %v1714
        %1843 = vst [vmem:[%s164 + $0x170] sm:$0xff] %v1715
        %1844 = vst [vmem:[%s164 + $0x178] sm:$0xff] %v1716
        %1845 = vst [vmem:[%s164 + $0x180] sm:$0xff] %v1717
        %1846 = vst [vmem:[%s164 + $0x188] sm:$0xff] %v1718
        %1847 = vst [vmem:[%s164 + $0x190] sm:$0xff] %v1719
        %1848 = vst [vmem:[%s164 + $0x198] sm:$0xff] %v1720
        %1849 = vst [vmem:[%s164 + $0x1a0] sm:$0xff] %v1721
        %1850 = vst [vmem:[%s164 + $0x1a8] sm:$0xff] %v1722
        %1851 = vst [vmem:[%s164 + $0x1b0] sm:$0xff] %v1723
        %1852 = vst [vmem:[%s164 + $0x1b8] sm:$0xff] %v1724
        %1853 = vst [vmem:[%s164 + $0x1c0] sm:$0xff] %v1725
        %1854 = vst [vmem:[%s164 + $0x1c8] sm:$0xff] %v1726
        %1855 = vst [vmem:[%s164 + $0x1d0] sm:$0xff] %v1727
        %1856 = vst [vmem:[%s164 + $0x1d8] sm:$0xff] %v1728
        %1857 = vst [vmem:[%s164 + $0x1e0] sm:$0xff] %v1729
        %1858 = vst [vmem:[%s164 + $0x1e8] sm:$0xff] %v1730
        %1859 = vst [vmem:[%s164 + $0x1f0] sm:$0xff] %v1731
        %1860 = vst [vmem:[%s164 + $0x1f8] sm:$0xff] %v1732
        %1861 = vst [vmem:[%s164 + $0x200] sm:$0xff] %v1733
        %1862 = vst [vmem:[%s164 + $0x208] sm:$0xff] %v1734
        %1863 = vst [vmem:[%s164 + $0x210] sm:$0xff] %v1735
        %1864 = vst [vmem:[%s164 + $0x218] sm:$0xff] %v1736
        %1865 = vst [vmem:[%s164 + $0x220] sm:$0xff] %v1737
        %1866 = vst [vmem:[%s164 + $0x228] sm:$0xff] %v1738
        %1867 = vst [vmem:[%s164 + $0x230] sm:$0xff] %v1739
        %1868 = vst [vmem:[%s164 + $0x238] sm:$0xff] %v1740
        %1869 = vst [vmem:[%s164 + $0x240] sm:$0xff] %v1741
        %1870 = vst [vmem:[%s164 + $0x248] sm:$0xff] %v1742
        %1871 = vst [vmem:[%s164 + $0x250] sm:$0xff] %v1743
        %1872 = vst [vmem:[%s164 + $0x258] sm:$0xff] %v1744
        %1873 = vst [vmem:[%s164 + $0x260] sm:$0xff] %v1745
        %1874 = vst [vmem:[%s164 + $0x268] sm:$0xff] %v1746
        %1875 = vst [vmem:[%s164 + $0x270] sm:$0xff] %v1747
        %1876 = vst [vmem:[%s164 + $0x278] sm:$0xff] %v1748
        %1877 = vst [vmem:[%s164 + $0x280] sm:$0xff] %v1749
        %1878 = vst [vmem:[%s164 + $0x288] sm:$0xff] %v1750
        %1879 = vst [vmem:[%s164 + $0x290] sm:$0xff] %v1751
        %1880 = vst [vmem:[%s164 + $0x298] sm:$0xff] %v1752
        %1881 = vst [vmem:[%s164 + $0x2a0] sm:$0xff] %v1753
        %1882 = vst [vmem:[%s164 + $0x2a8] sm:$0xff] %v1754
        %1883 = vst [vmem:[%s164 + $0x2b0] sm:$0xff] %v1755
        %1884 = vst [vmem:[%s164 + $0x2b8] sm:$0xff] %v1756
        %1885 = vst [vmem:[%s164 + $0x2c0] sm:$0xff] %v1757
        %1886 = vst [vmem:[%s164 + $0x2c8] sm:$0xff] %v1758
        %1887 = vst [vmem:[%s164 + $0x2d0] sm:$0xff] %v1759
        %1888 = vst [vmem:[%s164 + $0x2d8] sm:$0xff] %v1760
        %1889 = vst [vmem:[%s164 + $0x2e0] sm:$0xff] %v1761
        %1890 = vst [vmem:[%s164 + $0x2e8] sm:$0xff] %v1762
        %1891 = vst [vmem:[%s164 + $0x2f0] sm:$0xff] %v1763
        %1892 = vst [vmem:[%s164 + $0x2f8] sm:$0xff] %v1764
        %1893 = vst [vmem:[%s164 + $0x300] sm:$0xff] %v1765
        %1894 = vst [vmem:[%s164 + $0x308] sm:$0xff] %v1766
        %1895 = vst [vmem:[%s164 + $0x310] sm:$0xff] %v1767
        %1896 = vst [vmem:[%s164 + $0x318] sm:$0xff] %v1768
        %1897 = vst [vmem:[%s164 + $0x320] sm:$0xff] %v1769
        %1898 = vst [vmem:[%s164 + $0x328] sm:$0xff] %v1770
        %1899 = vst [vmem:[%s164 + $0x330] sm:$0xff] %v1771
        %1900 = vst [vmem:[%s164 + $0x338] sm:$0xff] %v1772
        %1901 = vst [vmem:[%s164 + $0x340] sm:$0xff] %v1773
        %1902 = vst [vmem:[%s164 + $0x348] sm:$0xff] %v1774
        %1903 = vst [vmem:[%s164 + $0x350] sm:$0xff] %v1775
        %1904 = vst [vmem:[%s164 + $0x358] sm:$0xff] %v1776
        %1905 = vst [vmem:[%s164 + $0x360] sm:$0xff] %v1777
        %1906 = vst [vmem:[%s164 + $0x368] sm:$0xff] %v1778
        %1907 = vst [vmem:[%s164 + $0x370] sm:$0xff] %v1779
        %1908 = vst [vmem:[%s164 + $0x378] sm:$0xff] %v1780
        %1909 = vst [vmem:[%s164 + $0x380] sm:$0xff] %v1781
        %1910 = vst [vmem:[%s164 + $0x388] sm:$0xff] %v1782
        %1911 = vst [vmem:[%s164 + $0x390] sm:$0xff] %v1783
        %1912 = vst [vmem:[%s164 + $0x398] sm:$0xff] %v1784
        %1913 = vst [vmem:[%s164 + $0x3a0] sm:$0xff] %v1785
        %1914 = vst [vmem:[%s164 + $0x3a8] sm:$0xff] %v1786
        %1915 = vst [vmem:[%s164 + $0x3b0] sm:$0xff] %v1787
        %1916 = vst [vmem:[%s164 + $0x3b8] sm:$0xff] %v1788
        %1917 = vst [vmem:[%s164 + $0x3c0] sm:$0xff] %v1789
        %1918 = vst [vmem:[%s164 + $0x3c8] sm:$0xff] %v1790
        %1919 = vst [vmem:[%s164 + $0x3d0] sm:$0xff] %v1791
        %1920 = vst [vmem:[%s164 + $0x3d8] sm:$0xff] %v1792
        %1921 = vst [vmem:[%s164 + $0x3e0] sm:$0xff] %v1793
        %1922 = vst [vmem:[%s164 + $0x3e8] sm:$0xff] %v1794
        %1923 = vst [vmem:[%s164 + $0x3f0] sm:$0xff] %v1795
        %1924 = vst [vmem:[%s164 + $0x3f8] sm:$0xff] %v1796
        %s1925 = sand.u32 %s93, 1
        %s1926 = scalar_lea.sflag [#allocation3], %s1925
        %s1927 = sand.u32 %s93, 1
        %s1928 = smul.addr %s1927, 1024
        %s1929 = scalar_lea.vmem [#allocation2], %s1928
        // Predicated region
        $region33: #{_lambda_.1} parent=31 // pred_check
          %p1930 = pneg %p103
        $region34: #{_lambda_.1} parent=31 // pred_check_branch
          %1932 = sbr.rel (%p1930) target = $region36
        $region35: #{_lambda_.1} parent=31 // pred_region
          %s1933 = smul.u32 32, %s17
          %s1935 = ssub.s32 16384, 16384
          %1936 = vsyncadd %s1926, %s1935
          %s1937 = smul.addr %s1933, 4
          %s1938 = smul.addr %s1937, 128
          %s1939 = scalar_lea.hbm %s3, %s1938
          %s1940 = sshll.u32 %s1929, 4
          %s1941 = int_to_ptr.vmem [resolvable:$true] %s1940
          %1946 = dma.vmem_to_hbm [thread:$0]  %s1941, 16384, %s1939, %s1926, 512, 512, 32
        $region36: #{_lambda_.1} parent=31 // pred_fallthru
          _
      $region32: #{_lambda_.1} parent=5 // pred_fallthru
        _
      %p1947 = scmp.le.s32.totalorder 2, %s12
      // Predicated region
      $region37: #{_lambda_.1} parent=5 // pred_check
        %p1948 = pneg %p1947
      $region38: #{_lambda_.1} parent=5 // pred_check_branch
        %1950 = sbr.rel (%p1948) target = $region40
      $region39: #{_lambda_.1} parent=5 // pred_region
        %s1951 = ssub.s32 %s12, 2
        // Predicated region
        $region41: #{_lambda_.1} parent=39 // pred_check
          %p1952 = pneg %p109
        $region42: #{_lambda_.1} parent=39 // pred_check_branch
          %1954 = sbr.rel (%p1952) target = $region44
        $region43: #{_lambda_.1} parent=39 // pred_region
          %s1955 = sand.u32 %s94, 1
          %s1956 = scalar_lea.sflag [#allocation3], %s1955
          %s1957 = sand.u32 %s94, 1
          %s1958 = smul.addr %s1957, 1024
          %s1959 = scalar_lea.vmem [#allocation2], %s1958
          %1960 = dma.done %s1956, 16384
        $region44: #{_lambda_.1} parent=39 // pred_fallthru
          _
      $region40: #{_lambda_.1} parent=5 // pred_fallthru
        _
    $region6: #{_lambda_.1} parent=1 // loop_footer
      %s16 = sadd.s32 1, %s12
    $region7: #{_lambda_.1} parent=1 // loop_footer_branch
      %11 = sbr.rel target = $region3
    $region8: #{_lambda_.1} parent=1 // loop_exit
      _
    %1961 = vsyncpa [#allocation3], 1
    %s1962 = scalar_lea.sflag [#allocation3], 1
    %1963 = vsyncpa %s1962, 1

</llo_original>
